<compile_context>
chip_gen: v5e
topology: v5e:2x2
jax: 0.10.0
libtpu: 0.0.40
codegen_flags: <defaults>
</compile_context>

<pallas_src>
import jax
import jax.numpy as jnp
from jax import lax
from jax.experimental import pallas as pl
from jax.experimental.pallas import tpu as pltpu

# ---------------- small synthetic Chameleon config ----------------
VOCAB = 128
HIDDEN = 64
NUM_HEADS = 4
NUM_KV_HEADS = 2
HEAD_DIM = HIDDEN // NUM_HEADS            # 16
Q_SIZE = NUM_HEADS * HEAD_DIM             # 64
KV_SIZE = NUM_KV_HEADS * HEAD_DIM         # 32
QK_WIDTH = Q_SIZE + KV_SIZE               # 96
QKV_WIDTH = Q_SIZE + 2 * KV_SIZE          # 128 (lane-dense)
INTERMEDIATE = 128
NUM_LAYERS = 2
SEQ = 8
RMS_EPS = 1e-5
LN_EPS = 1e-5
ROPE_THETA = 10000.0
GQA_GROUP = NUM_HEADS // NUM_KV_HEADS     # 2
SCALE = HEAD_DIM ** -0.5
NEG_INF = -1e30


# ---------------- fused whole-model kernel ----------------
def _chameleon_kernel(
    # layer-invariant inputs
    x_ref,          # (T, HIDDEN)            input embeddings (used at layer 0)
    cos_ref,        # (T, QKV_WIDTH) f32     full-width NEOX cos (1 on v lanes)
    sin_ref,        # (T, QKV_WIDTH) f32     full-width NEOX sin (0 on v lanes)
    m_avg_ref,      # (QKV_WIDTH, QKV_WIDTH) bf16  per-head averaging matrix
    r_rot_ref,      # (QKV_WIDTH, QKV_WIDTH) bf16  per-head rotate-half matrix
    bias_ref,       # (GQA_GROUP*T, T) f32   additive causal bias (0 / NEG_INF)
    fin_ref,        # (1, HIDDEN)            final RMSNorm weight
    # per-layer (stacked) weights, selected by grid index
    w_qkv_ref,      # (1, HIDDEN, QKV_WIDTH)      bf16
    w_o_ref,        # (1, Q_SIZE, HIDDEN)         bf16
    in_ln_ref,      # (1, 1, HIDDEN)              f32
    post_ln_ref,    # (1, 1, HIDDEN)              f32
    aff_w_ref,      # (1, 1, QKV_WIDTH) f32  q/k LN weight (q lanes pre-scaled
                    #                        by 1/sqrt(D); sqrt(eps) on v lanes)
    aff_b_ref,      # (1, 1, QKV_WIDTH) f32  q/k LN bias (q lanes pre-scaled; 0 on v)
    w_gu_ref,       # (1, HIDDEN, 2*INTERMEDIATE) bf16
    w_down_ref,     # (1, INTERMEDIATE, HIDDEN)   bf16
    # output
    o_ref,          # (T, HIDDEN)
    # scratch (carried across layers)
    s_scr,          # (T, HIDDEN) f32  pre-summed stream (hidden + residual)
):
    l = pl.program_id(0)

    @pl.when(l == 0)
    def _init():
        # residual is None at layer 0 -> carried sum is just the embeddings.
        s_scr[...] = x_ref[...]

    def rmsnorm(x, w):
        var = jnp.mean(x * x, axis=-1, keepdims=True)
        return x * lax.rsqrt(var + RMS_EPS) * w

    def mm(a, b):  # bf16 MXU matmul, f32 accumulation
        return jnp.dot(a.astype(jnp.bfloat16), b.astype(jnp.bfloat16),
                       preferred_element_type=jnp.float32)

    # ---- input RMSNorm on the carried (hidden + residual) stream ----
    x = s_scr[...]                                      # (T, HIDDEN) f32
    hn = rmsnorm(x, in_ln_ref[0])

    # ---- fused QKV projection ----
    qkv = mm(hn, w_qkv_ref[0])                          # (T, 128) f32

    # ---- Chameleon q/k LayerNorm + NEOX RoPE, fully lane-dense ----
    # Per-head mean / E[x^2] via block-diagonal averaging matmuls; both dots
    # depend only on qkv so they issue back-to-back into the MXU.
    m_avg = m_avg_ref[...]                              # bf16, exact entries
    qkv_bf = qkv.astype(jnp.bfloat16)
    sq_bf = (qkv * qkv).astype(jnp.bfloat16)
    mean_b = jnp.dot(qkv_bf, m_avg, preferred_element_type=jnp.float32)
    ex2_b = jnp.dot(sq_bf, m_avg, preferred_element_type=jnp.float32)
    var_b = jnp.maximum(ex2_b - mean_b * mean_b, 0.0)   # guard cancellation
    xn = (qkv - mean_b) * lax.rsqrt(var_b + LN_EPS)
    # v lanes: mean_b = var_b = 0 (zero m_avg columns) and aff_w = sqrt(eps),
    # aff_b = 0 there, so y == qkv on v lanes with no mask needed.  q lanes
    # carry the attention scale folded into aff_w/aff_b host-side.
    y = xn * aff_w_ref[0] + aff_b_ref[0]
    # NEOX rope: out = y*cos + rotate_half(y)*sin; rotate_half via block-diag
    # bf16 matmul (zero block + sin=0, cos=1 on v lanes -> identity on v).
    rot = jnp.dot(y.astype(jnp.bfloat16), r_rot_ref[...],
                  preferred_element_type=jnp.float32)
    qkv_p = y * cos_ref[...] + rot * sin_ref[...]       # (T, 128) f32
    qkv_pb = qkv_p.astype(jnp.bfloat16)

    # ---- causal GQA attention (grouped q stacking) + single o-projection ----
    bias = bias_ref[...]                                # (G*T, T)
    attn_cols = []
    for kv_h in range(NUM_KV_HEADS):                    # static, tiny loop
        k_h = qkv_pb[:, Q_SIZE + kv_h * HEAD_DIM:
                        Q_SIZE + (kv_h + 1) * HEAD_DIM]             # (T, D)
        v_h = qkv_pb[:, QK_WIDTH + kv_h * HEAD_DIM:
                        QK_WIDTH + (kv_h + 1) * HEAD_DIM]           # (T, D)
        h0 = kv_h * GQA_GROUP
        # stack the group's q-heads row-wise: one QK^T and one P*V per KV head
        q_grp = jnp.concatenate(
            [qkv_pb[:, (h0 + g) * HEAD_DIM:(h0 + g + 1) * HEAD_DIM]
             for g in range(GQA_GROUP)], axis=0)                    # (G*T, D)
        s = lax.dot_general(q_grp, k_h, (((1,), (1,)), ((), ())),
                            preferred_element_type=jnp.float32)     # (G*T, T)
        s = s + bias                                    # additive causal mask
        m = jnp.max(s, axis=-1, keepdims=True)
        p = jnp.exp(s - m)
        p = p * pl.reciprocal(jnp.sum(p, axis=-1, keepdims=True),
                              approx=True)
        o_grp = jnp.dot(p.astype(jnp.bfloat16), v_h,
                        preferred_element_type=jnp.float32)         # (G*T, D)
        for g in range(GQA_GROUP):
            attn_cols.append(o_grp[g * SEQ:(g + 1) * SEQ, :])
    attn_heads = jnp.concatenate(attn_cols, axis=-1)    # (T, Q_SIZE) head-major
    attn_o = mm(attn_heads, w_o_ref[0])                 # single (T,64)x(64,H)

    # ---- post-attention RMSNorm (fused residual add) ----
    x2 = attn_o + x
    hn2 = rmsnorm(x2, post_ln_ref[0])

    # ---- MLP: merged gate/up matmul, SiLU*Mul (tanh form -> EUP), down ----
    gu = mm(hn2, w_gu_ref[0])                           # (T, 2*I)
    gate = gu[:, :INTERMEDIATE]
    up = gu[:, INTERMEDIATE:]
    act = gate * (0.5 * (jnp.tanh(0.5 * gate) + 1.0)) * up
    h_out = mm(act, w_down_ref[0])                      # (T, HIDDEN)

    # ---- carry the pre-summed stream to the next layer (VMEM resident) ----
    final_sum = h_out + x2
    s_scr[...] = final_sum

    # NOTE: o_ref's block index is constant across the grid, so the output
    # block stays VMEM-resident and is written back after the last iteration.
    @pl.when(l == NUM_LAYERS - 1)
    def _finalize():
        o_ref[...] = rmsnorm(final_sum, fin_ref[...]).astype(o_ref.dtype)


# ---------------- constant-table builders (JAX glue) ----------------
def build_rope_tables(positions):
    inv_freq = 1.0 / (ROPE_THETA ** (
        jnp.arange(0, HEAD_DIM, 2, dtype=jnp.float32) / HEAD_DIM))
    freqs = positions.astype(jnp.float32)[:, None] * inv_freq[None, :]  # (T, D/2)
    cos_head = jnp.concatenate([jnp.cos(freqs)] * 2, axis=-1)           # (T, D)
    sin_head = jnp.concatenate([jnp.sin(freqs)] * 2, axis=-1)
    n_qk_heads = NUM_HEADS + NUM_KV_HEADS
    cos_full = jnp.concatenate(
        [jnp.tile(cos_head, (1, n_qk_heads)),
         jnp.ones((SEQ, KV_SIZE), jnp.float32)], axis=-1)               # (T, 128)
    sin_full = jnp.concatenate(
        [jnp.tile(sin_head, (1, n_qk_heads)),
         jnp.zeros((SEQ, KV_SIZE), jnp.float32)], axis=-1)
    return cos_full, sin_full


def build_norm_matrices():
    lane = jnp.arange(QKV_WIDTH)
    head_i = jnp.where(lane < QK_WIDTH, lane // HEAD_DIM, -1)
    head_j = jnp.where(lane < QK_WIDTH, lane // HEAD_DIM, -2)   # v cols -> all-zero
    same = head_i[:, None] == head_j[None, :]
    m_avg = same.astype(jnp.float32) / HEAD_DIM                 # per-head mean bcast
    half = HEAD_DIM // 2
    within = lane % HEAD_DIM
    i_w, j_w = within[:, None], within[None, :]
    neg = same & (j_w < half) & (i_w == j_w + half)             # out_j = -x_{j+half}
    pos = same & (j_w >= half) & (i_w == j_w - half)            # out_j = +x_{j-half}
    r_rot = pos.astype(jnp.float32) - neg.astype(jnp.float32)
    # 1/16 and +-1 are exact in bf16 -> MXU-native operands.
    return m_avg.astype(jnp.bfloat16), r_rot.astype(jnp.bfloat16)


def build_causal_bias():
    row = jnp.arange(SEQ)
    causal = row[:, None] >= row[None, :]
    bias = jnp.where(causal, 0.0, NEG_INF).astype(jnp.float32)  # (T, T)
    return jnp.tile(bias, (GQA_GROUP, 1))                       # (G*T, T)


def build_affine_tables(q_ln_w, q_ln_b, k_ln_w, k_ln_b):
    # Flatten per-head LN params lane-wise; fold the attention scale into the
    # q lanes (RoPE is linear so it commutes); sqrt(eps) pass-through on v.
    qw = q_ln_w.reshape(NUM_LAYERS, 1, Q_SIZE) * SCALE
    qb = q_ln_b.reshape(NUM_LAYERS, 1, Q_SIZE) * SCALE
    kw = k_ln_w.reshape(NUM_LAYERS, 1, KV_SIZE)
    kb = k_ln_b.reshape(NUM_LAYERS, 1, KV_SIZE)
    vw = jnp.full((NUM_LAYERS, 1, KV_SIZE), jnp.sqrt(LN_EPS), jnp.float32)
    vb = jnp.zeros((NUM_LAYERS, 1, KV_SIZE), jnp.float32)
    aff_w = jnp.concatenate([qw, kw, vw], axis=-1)               # (L, 1, 128)
    aff_b = jnp.concatenate([qb, kb, vb], axis=-1)
    return aff_w, aff_b


# ---------------- model forward (one pallas_call) ----------------
@jax.jit
def chameleon_forward(params, input_ids, positions):
    h0 = params["embed"][input_ids].astype(jnp.float32)         # (T, HIDDEN)
    cos_full, sin_full = build_rope_tables(positions)
    m_avg, r_rot = build_norm_matrices()
    bias = build_causal_bias()
    aff_w, aff_b = build_affine_tables(params["q_ln_w"], params["q_ln_b"],
                                       params["k_ln_w"], params["k_ln_b"])

    return pl.pallas_call(
        _chameleon_kernel,
        out_shape=jax.ShapeDtypeStruct((SEQ, HIDDEN), jnp.float32),
        grid=(NUM_LAYERS,),
        in_specs=[
            pl.BlockSpec((SEQ, HIDDEN), lambda l: (0, 0)),                 # embeddings
            pl.BlockSpec((SEQ, QKV_WIDTH), lambda l: (0, 0)),              # cos
            pl.BlockSpec((SEQ, QKV_WIDTH), lambda l: (0, 0)),              # sin
            pl.BlockSpec((QKV_WIDTH, QKV_WIDTH), lambda l: (0, 0)),        # m_avg
            pl.BlockSpec((QKV_WIDTH, QKV_WIDTH), lambda l: (0, 0)),        # r_rot
            pl.BlockSpec((GQA_GROUP * SEQ, SEQ), lambda l: (0, 0)),        # causal bias
            pl.BlockSpec((1, HIDDEN), lambda l: (0, 0)),                   # final norm
            pl.BlockSpec((1, HIDDEN, QKV_WIDTH), lambda l: (l, 0, 0)),     # w_qkv
            pl.BlockSpec((1, Q_SIZE, HIDDEN), lambda l: (l, 0, 0)),        # w_o
            pl.BlockSpec((1, 1, HIDDEN), lambda l: (l, 0, 0)),             # input_ln
            pl.BlockSpec((1, 1, HIDDEN), lambda l: (l, 0, 0)),             # post_ln
            pl.BlockSpec((1, 1, QKV_WIDTH), lambda l: (l, 0, 0)),          # aff_w
            pl.BlockSpec((1, 1, QKV_WIDTH), lambda l: (l, 0, 0)),          # aff_b
            pl.BlockSpec((1, HIDDEN, 2 * INTERMEDIATE), lambda l: (l, 0, 0)),  # w_gate_up
            pl.BlockSpec((1, INTERMEDIATE, HIDDEN), lambda l: (l, 0, 0)),      # w_down
        ],
        out_specs=pl.BlockSpec((SEQ, HIDDEN), lambda l: (0, 0)),
        scratch_shapes=[pltpu.VMEM((SEQ, HIDDEN), jnp.float32)],
        compiler_params=pltpu.CompilerParams(
            dimension_semantics=("arbitrary",)),   # layer axis carries state
    )(h0, cos_full, sin_full, m_avg, r_rot, bias, params["final_norm"],
      params["w_qkv"], params["w_o"], params["input_ln"], params["post_ln"],
      aff_w, aff_b, params["w_gate_up"], params["w_down"])


# ---------------- pure-JAX reference (f32) for correctness check ----------------
def reference_forward(params, input_ids, positions):
    h = params["embed"][input_ids]
    inv_freq = 1.0 / (ROPE_THETA ** (
        jnp.arange(0, HEAD_DIM, 2, dtype=jnp.float32) / HEAD_DIM))
    freqs = positions.astype(jnp.float32)[:, None] * inv_freq[None, :]
    cos = jnp.concatenate([jnp.cos(freqs)] * 2, -1)
    sin = jnp.concatenate([jnp.sin(freqs)] * 2, -1)

    def rms(x, w):
        return x * lax.rsqrt(jnp.mean(x * x, -1, keepdims=True) + RMS_EPS) * w

    def ln_heads(x, w, b):
        mu = jnp.mean(x, -1, keepdims=True)
        var = jnp.mean((x - mu) ** 2, -1, keepdims=True)
        return (x - mu) * lax.rsqrt(var + LN_EPS) * w + b

    def rope(x):
        half = HEAD_DIM // 2
        rot = jnp.concatenate([-x[..., half:], x[..., :half]], -1)
        return x * cos[:, None, :] + rot * sin[:, None, :]

    residual = jnp.zeros_like(h)
    for l in range(NUM_LAYERS):
        x = h + residual
        residual = x
        hn = rms(x, params["input_ln"][l])
        qkv = hn @ params["w_qkv"][l].astype(jnp.float32)
        q = qkv[:, :Q_SIZE].reshape(SEQ, NUM_HEADS, HEAD_DIM)
        k = qkv[:, Q_SIZE:QK_WIDTH].reshape(SEQ, NUM_KV_HEADS, HEAD_DIM)
        v = qkv[:, QK_WIDTH:].reshape(SEQ, NUM_KV_HEADS, HEAD_DIM)
        q = rope(ln_heads(q, params["q_ln_w"][l], params["q_ln_b"][l]))
        k = rope(ln_heads(k, params["k_ln_w"][l], params["k_ln_b"][l]))
        k_full = jnp.repeat(k, GQA_GROUP, axis=1)
        v_full = jnp.repeat(v, GQA_GROUP, axis=1)
        s = jnp.einsum("qhd,khd->hqk", q, k_full) * SCALE
        mask = jnp.tril(jnp.ones((SEQ, SEQ), bool))
        s = jnp.where(mask[None], s, NEG_INF)
        p = jax.nn.softmax(s, axis=-1)
        o = jnp.einsum("hqk,khd->qhd", p, v_full).reshape(SEQ, Q_SIZE)
        attn_out = o @ params["w_o"][l].astype(jnp.float32)
        x2 = attn_out + residual
        residual = x2
        hn2 = rms(x2, params["post_ln"][l])
        gu = hn2 @ params["w_gate_up"][l].astype(jnp.float32)
        g, u = gu[:, :INTERMEDIATE], gu[:, INTERMEDIATE:]
        h = (g * jax.nn.sigmoid(g) * u) @ params["w_down"][l].astype(jnp.float32)
    return rms(h + residual, params["final_norm"])


# ---------------- deterministic parameter init (layer-stacked) ----------------
def init_params(key):
    keys = jax.random.split(key, 2 + NUM_LAYERS)
    embed = 0.02 * jax.random.normal(keys[0], (VOCAB, HIDDEN), jnp.float32)
    final_norm = 1.0 + 0.01 * jax.random.normal(keys[1], (1, HIDDEN), jnp.float32)
    w_qkv, w_o, in_ln, post_ln = [], [], [], []
    q_ln_w, q_ln_b, k_ln_w, k_ln_b = [], [], [], []
    w_gu, w_down = [], []
    for li in range(NUM_LAYERS):
        lk = jax.random.split(keys[2 + li], 10)
        w_qkv.append(0.02 * jax.random.normal(lk[0], (HIDDEN, QKV_WIDTH), jnp.float32))
        w_o.append(0.02 * jax.random.normal(lk[1], (Q_SIZE, HIDDEN), jnp.float32))
        q_ln_w.append(1.0 + 0.01 * jax.random.normal(lk[2], (NUM_HEADS, HEAD_DIM), jnp.float32))
        q_ln_b.append(0.01 * jax.random.normal(lk[3], (NUM_HEADS, HEAD_DIM), jnp.float32))
        k_ln_w.append(1.0 + 0.01 * jax.random.normal(lk[4], (NUM_KV_HEADS, HEAD_DIM), jnp.float32))
        k_ln_b.append(0.01 * jax.random.normal(lk[5], (NUM_KV_HEADS, HEAD_DIM), jnp.float32))
        in_ln.append(1.0 + 0.01 * jax.random.normal(lk[6], (1, HIDDEN), jnp.float32))
        post_ln.append(1.0 + 0.01 * jax.random.normal(lk[7], (1, HIDDEN), jnp.float32))
        w_gu.append(0.02 * jax.random.normal(lk[8], (HIDDEN, 2 * INTERMEDIATE), jnp.float32))
        w_down.append(0.02 * jax.random.normal(lk[9], (INTERMEDIATE, HIDDEN), jnp.float32))
    return {
        "embed": embed,
        "final_norm": final_norm,
        # MXU weights stored in bf16 (f32 accumulation in the kernel).
        "w_qkv": jnp.stack(w_qkv).astype(jnp.bfloat16),
        "w_o": jnp.stack(w_o).astype(jnp.bfloat16),
        "w_gate_up": jnp.stack(w_gu).astype(jnp.bfloat16),
        "w_down": jnp.stack(w_down).astype(jnp.bfloat16),
        # norm params stay f32.
        "input_ln": jnp.stack(in_ln),      # (L, 1, HIDDEN)
        "post_ln": jnp.stack(post_ln),     # (L, 1, HIDDEN)
        "q_ln_w": jnp.stack(q_ln_w),       # (L, NUM_HEADS, HEAD_DIM)
        "q_ln_b": jnp.stack(q_ln_b),
        "k_ln_w": jnp.stack(k_ln_w),       # (L, NUM_KV_HEADS, HEAD_DIM)
        "k_ln_b": jnp.stack(k_ln_b),
    }


if __name__ == "__main__":
    key = jax.random.PRNGKey(0)
    pkey, ikey = jax.random.split(key)
    params = init_params(pkey)
    input_ids = jax.random.randint(ikey, (SEQ,), 0, VOCAB, dtype=jnp.int32)
    positions = jnp.arange(SEQ, dtype=jnp.int32)

    out = chameleon_forward(params, input_ids, positions)
    out = jax.block_until_ready(out)

    assert out.shape == (SEQ, HIDDEN), out.shape
    assert bool(jnp.all(jnp.isfinite(out)))

    ref = reference_forward(params, input_ids, positions)
    max_err = float(jnp.max(jnp.abs(out - ref)))
    assert max_err < 5e-2, f"mismatch vs reference: {max_err}"

    print("KERNEL_OK")
</pallas_src>

<mosaic_0001>
module attributes {stable_mosaic.version = 11 : i64} {
  func.func @_chameleon_kernel(%arg0: i32, %arg1: memref<8x64xf32, #tpu.memory_space<vmem>>, %arg2: memref<8x128xf32, #tpu.memory_space<vmem>>, %arg3: memref<8x128xf32, #tpu.memory_space<vmem>>, %arg4: memref<128x128xbf16, #tpu.memory_space<vmem>>, %arg5: memref<128x128xbf16, #tpu.memory_space<vmem>>, %arg6: memref<16x8xf32, #tpu.memory_space<vmem>>, %arg7: memref<1x64xf32, #tpu.memory_space<vmem>>, %arg8: memref<1x64x128xbf16, #tpu.memory_space<vmem>>, %arg9: memref<1x64x64xbf16, #tpu.memory_space<vmem>>, %arg10: memref<1x1x64xf32, #tpu.memory_space<vmem>>, %arg11: memref<1x1x64xf32, #tpu.memory_space<vmem>>, %arg12: memref<1x1x128xf32, #tpu.memory_space<vmem>>, %arg13: memref<1x1x128xf32, #tpu.memory_space<vmem>>, %arg14: memref<1x64x256xbf16, #tpu.memory_space<vmem>>, %arg15: memref<1x128x64xbf16, #tpu.memory_space<vmem>>, %arg16: memref<8x64xf32, #tpu.memory_space<vmem>>, %arg17: memref<8x64xf32, #tpu.memory_space<vmem>>) attributes {dimension_semantics = [#tpu.dimension_semantics<arbitrary>], iteration_bounds = array<i64: 2>, scalar_prefetch = 0 : i64, scratch_operands = 1 : i64, tpu.core_type = #tpu.core_type<tc>, window_params = [{pipeline_mode = #tpu.pipeline_mode<synchronous>, transform_indices = @transform_0, window_bounds = array<i64: 8, 64>}, {pipeline_mode = #tpu.pipeline_mode<synchronous>, transform_indices = @transform_1, window_bounds = array<i64: 8, 128>}, {pipeline_mode = #tpu.pipeline_mode<synchronous>, transform_indices = @transform_2, window_bounds = array<i64: 8, 128>}, {pipeline_mode = #tpu.pipeline_mode<synchronous>, transform_indices = @transform_3, window_bounds = array<i64: 128, 128>}, {pipeline_mode = #tpu.pipeline_mode<synchronous>, transform_indices = @transform_4, window_bounds = array<i64: 128, 128>}, {pipeline_mode = #tpu.pipeline_mode<synchronous>, transform_indices = @transform_5, window_bounds = array<i64: 16, 8>}, {pipeline_mode = #tpu.pipeline_mode<synchronous>, transform_indices = @transform_6, window_bounds = array<i64: 1, 64>}, {transform_indices = @transform_7, window_bounds = array<i64: 1, 64, 128>}, {transform_indices = @transform_8, window_bounds = array<i64: 1, 64, 64>}, {transform_indices = @transform_9, window_bounds = array<i64: 1, 1, 64>}, {transform_indices = @transform_10, window_bounds = array<i64: 1, 1, 64>}, {transform_indices = @transform_11, window_bounds = array<i64: 1, 1, 128>}, {transform_indices = @transform_12, window_bounds = array<i64: 1, 1, 128>}, {transform_indices = @transform_13, window_bounds = array<i64: 1, 64, 256>}, {transform_indices = @transform_14, window_bounds = array<i64: 1, 128, 64>}, {pipeline_mode = #tpu.pipeline_mode<synchronous>, transform_indices = @transform_15, window_bounds = array<i64: 8, 64>}]} {
    %c0_i32 = arith.constant 0 : i32
    %0 = arith.cmpi eq, %arg0, %c0_i32 : i32
    %1 = arith.extui %0 : i1 to i32
    %c0_i32_0 = arith.constant 0 : i32
    %2 = arith.cmpi ne, %1, %c0_i32_0 : i32
    scf.if %2 {
      %c0_64 = arith.constant 0 : index
      %c0_65 = arith.constant 0 : index
      %141 = vector.load %arg1[%c0_64, %c0_65] : memref<8x64xf32, #tpu.memory_space<vmem>>, vector<8x64xf32>
      %c0_66 = arith.constant 0 : index
      %c0_67 = arith.constant 0 : index
      %142 = vector.load %arg17[%c0_66, %c0_67] : memref<8x64xf32, #tpu.memory_space<vmem>>, vector<8x64xf32>
      tpu.vector_store %arg17[%c0_66, %c0_67], %141 {strides = array<i32>} : memref<8x64xf32, #tpu.memory_space<vmem>>, vector<8x64xf32>,
    } else {
    }
    %c0 = arith.constant 0 : index
    %c0_1 = arith.constant 0 : index
    %3 = vector.load %arg17[%c0, %c0_1] : memref<8x64xf32, #tpu.memory_space<vmem>>, vector<8x64xf32>
    %c0_2 = arith.constant 0 : index
    %c0_3 = arith.constant 0 : index
    %c0_4 = arith.constant 0 : index
    %4 = vector.load %arg10[%c0_2, %c0_3, %c0_4] : memref<1x1x64xf32, #tpu.memory_space<vmem>>, vector<1x1x64xf32>
    %5 = vector.shape_cast %4 : vector<1x1x64xf32> to vector<1x64xf32>
    %6 = arith.mulf %3, %3 : vector<8x64xf32>
    %cst = arith.constant dense<0.000000e+00> : vector<8xf32>
    %7 = vector.multi_reduction <add>, %6, %cst [1] : vector<8x64xf32> to vector<8xf32>
    %8 = vector.shape_cast %7 : vector<8xf32> to vector<8x1xf32>
    %cst_5 = arith.constant 6.400000e+01 : f32
    %9 = vector.broadcast %cst_5 : f32 to vector<8x1xf32>
    %10 = arith.divf %8, %9 : vector<8x1xf32>
    %cst_6 = arith.constant 9.99999974E-6 : f32
    %11 = vector.broadcast %cst_6 : f32 to vector<8x1xf32>
    %12 = arith.addf %10, %11 : vector<8x1xf32>
    %13 = math.rsqrt %12 : vector<8x1xf32>
    %14 = vector.broadcast %13 : vector<8x1xf32> to vector<8x64xf32>
    %15 = arith.mulf %3, %14 : vector<8x64xf32>
    %16 = vector.broadcast %5 : vector<1x64xf32> to vector<8x64xf32>
    %17 = arith.mulf %15, %16 : vector<8x64xf32>
    %c0_7 = arith.constant 0 : index
    %c0_8 = arith.constant 0 : index
    %c0_9 = arith.constant 0 : index
    %18 = vector.load %arg8[%c0_7, %c0_8, %c0_9] : memref<1x64x128xbf16, #tpu.memory_space<vmem>>, vector<1x64x128xbf16>
    %19 = vector.shape_cast %18 : vector<1x64x128xbf16> to vector<64x128xbf16>
    %20 = arith.truncf %17 : vector<8x64xf32> to vector<8x64xbf16>
    %cst_10 = arith.constant dense<0.000000e+00> : vector<8x128xf32>
    %21 = tpu.matmul %20, %19, %cst_10 {dimension_numbers = #tpu.dot_dimension_numbers<[1], [0], [0], [1], [0, 0, 1, 1], [], []>} : vector<8x64xbf16>, vector<64x128xbf16>, vector<8x128xf32> -> vector<8x128xf32>
    %c0_11 = arith.constant 0 : index
    %c0_12 = arith.constant 0 : index
    %22 = vector.load %arg4[%c0_11, %c0_12] : memref<128x128xbf16, #tpu.memory_space<vmem>>, vector<128x128xbf16>
    %23 = arith.truncf %21 : vector<8x128xf32> to vector<8x128xbf16>
    %24 = arith.mulf %21, %21 : vector<8x128xf32>
    %25 = arith.truncf %24 : vector<8x128xf32> to vector<8x128xbf16>
    %cst_13 = arith.constant dense<0.000000e+00> : vector<8x128xf32>
    %26 = tpu.matmul %23, %22, %cst_13 {dimension_numbers = #tpu.dot_dimension_numbers<[1], [0], [0], [1], [0, 0, 1, 1], [], []>} : vector<8x128xbf16>, vector<128x128xbf16>, vector<8x128xf32> -> vector<8x128xf32>
    %cst_14 = arith.constant dense<0.000000e+00> : vector<8x128xf32>
    %27 = tpu.matmul %25, %22, %cst_14 {dimension_numbers = #tpu.dot_dimension_numbers<[1], [0], [0], [1], [0, 0, 1, 1], [], []>} : vector<8x128xbf16>, vector<128x128xbf16>, vector<8x128xf32> -> vector<8x128xf32>
    %28 = arith.mulf %26, %26 : vector<8x128xf32>
    %29 = arith.subf %27, %28 : vector<8x128xf32>
    %cst_15 = arith.constant 0.000000e+00 : f32
    %30 = vector.broadcast %cst_15 : f32 to vector<8x128xf32>
    %31 = arith.maximumf %29, %30 : vector<8x128xf32>
    %32 = arith.subf %21, %26 : vector<8x128xf32>
    %cst_16 = arith.constant 9.99999974E-6 : f32
    %33 = vector.broadcast %cst_16 : f32 to vector<8x128xf32>
    %34 = arith.addf %31, %33 : vector<8x128xf32>
    %35 = math.rsqrt %34 : vector<8x128xf32>
    %36 = arith.mulf %32, %35 : vector<8x128xf32>
    %c0_17 = arith.constant 0 : index
    %c0_18 = arith.constant 0 : index
    %c0_19 = arith.constant 0 : index
    %37 = vector.load %arg12[%c0_17, %c0_18, %c0_19] : memref<1x1x128xf32, #tpu.memory_space<vmem>>, vector<1x1x128xf32>
    %38 = vector.shape_cast %37 : vector<1x1x128xf32> to vector<1x128xf32>
    %39 = vector.broadcast %38 : vector<1x128xf32> to vector<8x128xf32>
    %40 = arith.mulf %36, %39 : vector<8x128xf32>
    %c0_20 = arith.constant 0 : index
    %c0_21 = arith.constant 0 : index
    %c0_22 = arith.constant 0 : index
    %41 = vector.load %arg13[%c0_20, %c0_21, %c0_22] : memref<1x1x128xf32, #tpu.memory_space<vmem>>, vector<1x1x128xf32>
    %42 = vector.shape_cast %41 : vector<1x1x128xf32> to vector<1x128xf32>
    %43 = vector.broadcast %42 : vector<1x128xf32> to vector<8x128xf32>
    %44 = arith.addf %40, %43 : vector<8x128xf32>
    %45 = arith.truncf %44 : vector<8x128xf32> to vector<8x128xbf16>
    %c0_23 = arith.constant 0 : index
    %c0_24 = arith.constant 0 : index
    %46 = vector.load %arg5[%c0_23, %c0_24] : memref<128x128xbf16, #tpu.memory_space<vmem>>, vector<128x128xbf16>
    %cst_25 = arith.constant dense<0.000000e+00> : vector<8x128xf32>
    %47 = tpu.matmul %45, %46, %cst_25 {dimension_numbers = #tpu.dot_dimension_numbers<[1], [0], [0], [1], [0, 0, 1, 1], [], []>} : vector<8x128xbf16>, vector<128x128xbf16>, vector<8x128xf32> -> vector<8x128xf32>
    %c0_26 = arith.constant 0 : index
    %c0_27 = arith.constant 0 : index
    %48 = vector.load %arg2[%c0_26, %c0_27] : memref<8x128xf32, #tpu.memory_space<vmem>>, vector<8x128xf32>
    %49 = arith.mulf %44, %48 : vector<8x128xf32>
    %c0_28 = arith.constant 0 : index
    %c0_29 = arith.constant 0 : index
    %50 = vector.load %arg3[%c0_28, %c0_29] : memref<8x128xf32, #tpu.memory_space<vmem>>, vector<8x128xf32>
    %51 = arith.mulf %47, %50 : vector<8x128xf32>
    %52 = arith.addf %49, %51 : vector<8x128xf32>
    %53 = arith.truncf %52 : vector<8x128xf32> to vector<8x128xbf16>
    %c0_30 = arith.constant 0 : index
    %c0_31 = arith.constant 0 : index
    %54 = vector.load %arg6[%c0_30, %c0_31] : memref<16x8xf32, #tpu.memory_space<vmem>>, vector<16x8xf32>
    %55 = vector.extract_strided_slice %53 {offsets = [0, 64], sizes = [8, 16], strides = [1, 1]} : vector<8x128xbf16> to vector<8x16xbf16>
    %56 = vector.extract_strided_slice %53 {offsets = [0, 96], sizes = [8, 16], strides = [1, 1]} : vector<8x128xbf16> to vector<8x16xbf16>
    %57 = vector.extract_strided_slice %53 {offsets = [0, 0], sizes = [8, 16], strides = [1, 1]} : vector<8x128xbf16> to vector<8x16xbf16>
    %58 = vector.extract_strided_slice %53 {offsets = [0, 16], sizes = [8, 16], strides = [1, 1]} : vector<8x128xbf16> to vector<8x16xbf16>
    %59 = tpu.concatenate %57, %58 in 0 : vector<8x16xbf16>, vector<8x16xbf16> -> vector<16x16xbf16>
    %cst_32 = arith.constant dense<0.000000e+00> : vector<16x8xf32>
    %60 = tpu.matmul %59, %55, %cst_32 {dimension_numbers = #tpu.dot_dimension_numbers<[1], [1], [0], [0], [0, 0, 1, 0], [], []>} : vector<16x16xbf16>, vector<8x16xbf16>, vector<16x8xf32> -> vector<16x8xf32>
    %61 = arith.addf %60, %54 : vector<16x8xf32>
    %cst_33 = arith.constant dense<0xFF800000> : vector<16xf32>
    %62 = vector.multi_reduction <maximumf>, %61, %cst_33 [1] : vector<16x8xf32> to vector<16xf32>
    %63 = vector.shape_cast %62 : vector<16xf32> to vector<16x1xf32>
    %64 = vector.broadcast %63 : vector<16x1xf32> to vector<16x8xf32>
    %65 = arith.subf %61, %64 : vector<16x8xf32>
    %66 = math.exp %65 : vector<16x8xf32>
    %cst_34 = arith.constant dense<0.000000e+00> : vector<16xf32>
    %67 = vector.multi_reduction <add>, %66, %cst_34 [1] : vector<16x8xf32> to vector<16xf32>
    %68 = vector.shape_cast %67 : vector<16xf32> to vector<16x1xf32>
    %69 = tpu.reciprocal %68 {approx = true} : vector<16x1xf32> -> vector<16x1xf32>
    %70 = vector.broadcast %69 : vector<16x1xf32> to vector<16x8xf32>
    %71 = arith.mulf %66, %70 : vector<16x8xf32>
    %72 = arith.truncf %71 : vector<16x8xf32> to vector<16x8xbf16>
    %cst_35 = arith.constant dense<0.000000e+00> : vector<16x16xf32>
    %73 = tpu.matmul %72, %56, %cst_35 {dimension_numbers = #tpu.dot_dimension_numbers<[1], [0], [0], [1], [0, 0, 1, 1], [], []>} : vector<16x8xbf16>, vector<8x16xbf16>, vector<16x16xf32> -> vector<16x16xf32>
    %74 = vector.extract_strided_slice %73 {offsets = [0, 0], sizes = [8, 16], strides = [1, 1]} : vector<16x16xf32> to vector<8x16xf32>
    %75 = vector.extract_strided_slice %73 {offsets = [8, 0], sizes = [8, 16], strides = [1, 1]} : vector<16x16xf32> to vector<8x16xf32>
    %76 = vector.extract_strided_slice %53 {offsets = [0, 80], sizes = [8, 16], strides = [1, 1]} : vector<8x128xbf16> to vector<8x16xbf16>
    %77 = vector.extract_strided_slice %53 {offsets = [0, 112], sizes = [8, 16], strides = [1, 1]} : vector<8x128xbf16> to vector<8x16xbf16>
    %78 = vector.extract_strided_slice %53 {offsets = [0, 32], sizes = [8, 16], strides = [1, 1]} : vector<8x128xbf16> to vector<8x16xbf16>
    %79 = vector.extract_strided_slice %53 {offsets = [0, 48], sizes = [8, 16], strides = [1, 1]} : vector<8x128xbf16> to vector<8x16xbf16>
    %80 = tpu.concatenate %78, %79 in 0 : vector<8x16xbf16>, vector<8x16xbf16> -> vector<16x16xbf16>
    %cst_36 = arith.constant dense<0.000000e+00> : vector<16x8xf32>
    %81 = tpu.matmul %80, %76, %cst_36 {dimension_numbers = #tpu.dot_dimension_numbers<[1], [1], [0], [0], [0, 0, 1, 0], [], []>} : vector<16x16xbf16>, vector<8x16xbf16>, vector<16x8xf32> -> vector<16x8xf32>
    %82 = arith.addf %81, %54 : vector<16x8xf32>
    %cst_37 = arith.constant dense<0xFF800000> : vector<16xf32>
    %83 = vector.multi_reduction <maximumf>, %82, %cst_37 [1] : vector<16x8xf32> to vector<16xf32>
    %84 = vector.shape_cast %83 : vector<16xf32> to vector<16x1xf32>
    %85 = vector.broadcast %84 : vector<16x1xf32> to vector<16x8xf32>
    %86 = arith.subf %82, %85 : vector<16x8xf32>
    %87 = math.exp %86 : vector<16x8xf32>
    %cst_38 = arith.constant dense<0.000000e+00> : vector<16xf32>
    %88 = vector.multi_reduction <add>, %87, %cst_38 [1] : vector<16x8xf32> to vector<16xf32>
    %89 = vector.shape_cast %88 : vector<16xf32> to vector<16x1xf32>
    %90 = tpu.reciprocal %89 {approx = true} : vector<16x1xf32> -> vector<16x1xf32>
    %91 = vector.broadcast %90 : vector<16x1xf32> to vector<16x8xf32>
    %92 = arith.mulf %87, %91 : vector<16x8xf32>
    %93 = arith.truncf %92 : vector<16x8xf32> to vector<16x8xbf16>
    %cst_39 = arith.constant dense<0.000000e+00> : vector<16x16xf32>
    %94 = tpu.matmul %93, %77, %cst_39 {dimension_numbers = #tpu.dot_dimension_numbers<[1], [0], [0], [1], [0, 0, 1, 1], [], []>} : vector<16x8xbf16>, vector<8x16xbf16>, vector<16x16xf32> -> vector<16x16xf32>
    %95 = vector.extract_strided_slice %94 {offsets = [0, 0], sizes = [8, 16], strides = [1, 1]} : vector<16x16xf32> to vector<8x16xf32>
    %96 = vector.extract_strided_slice %94 {offsets = [8, 0], sizes = [8, 16], strides = [1, 1]} : vector<16x16xf32> to vector<8x16xf32>
    %97 = tpu.concatenate %74, %75, %95, %96 in 1 : vector<8x16xf32>, vector<8x16xf32>, vector<8x16xf32>, vector<8x16xf32> -> vector<8x64xf32>
    %c0_40 = arith.constant 0 : index
    %c0_41 = arith.constant 0 : index
    %c0_42 = arith.constant 0 : index
    %98 = vector.load %arg9[%c0_40, %c0_41, %c0_42] : memref<1x64x64xbf16, #tpu.memory_space<vmem>>, vector<1x64x64xbf16>
    %99 = vector.shape_cast %98 : vector<1x64x64xbf16> to vector<64x64xbf16>
    %100 = arith.truncf %97 : vector<8x64xf32> to vector<8x64xbf16>
    %cst_43 = arith.constant dense<0.000000e+00> : vector<8x64xf32>
    %101 = tpu.matmul %100, %99, %cst_43 {dimension_numbers = #tpu.dot_dimension_numbers<[1], [0], [0], [1], [0, 0, 1, 1], [], []>} : vector<8x64xbf16>, vector<64x64xbf16>, vector<8x64xf32> -> vector<8x64xf32>
    %102 = arith.addf %101, %3 : vector<8x64xf32>
    %c0_44 = arith.constant 0 : index
    %c0_45 = arith.constant 0 : index
    %c0_46 = arith.constant 0 : index
    %103 = vector.load %arg11[%c0_44, %c0_45, %c0_46] : memref<1x1x64xf32, #tpu.memory_space<vmem>>, vector<1x1x64xf32>
    %104 = vector.shape_cast %103 : vector<1x1x64xf32> to vector<1x64xf32>
    %105 = arith.mulf %102, %102 : vector<8x64xf32>
    %cst_47 = arith.constant dense<0.000000e+00> : vector<8xf32>
    %106 = vector.multi_reduction <add>, %105, %cst_47 [1] : vector<8x64xf32> to vector<8xf32>
    %107 = vector.shape_cast %106 : vector<8xf32> to vector<8x1xf32>
    %cst_48 = arith.constant 6.400000e+01 : f32
    %108 = vector.broadcast %cst_48 : f32 to vector<8x1xf32>
    %109 = arith.divf %107, %108 : vector<8x1xf32>
    %cst_49 = arith.constant 9.99999974E-6 : f32
    %110 = vector.broadcast %cst_49 : f32 to vector<8x1xf32>
    %111 = arith.addf %109, %110 : vector<8x1xf32>
    %112 = math.rsqrt %111 : vector<8x1xf32>
    %113 = vector.broadcast %112 : vector<8x1xf32> to vector<8x64xf32>
    %114 = arith.mulf %102, %113 : vector<8x64xf32>
    %115 = vector.broadcast %104 : vector<1x64xf32> to vector<8x64xf32>
    %116 = arith.mulf %114, %115 : vector<8x64xf32>
    %c0_50 = arith.constant 0 : index
    %c0_51 = arith.constant 0 : index
    %c0_52 = arith.constant 0 : index
    %117 = vector.load %arg14[%c0_50, %c0_51, %c0_52] : memref<1x64x256xbf16, #tpu.memory_space<vmem>>, vector<1x64x256xbf16>
    %118 = vector.shape_cast %117 : vector<1x64x256xbf16> to vector<64x256xbf16>
    %119 = arith.truncf %116 : vector<8x64xf32> to vector<8x64xbf16>
    %cst_53 = arith.constant dense<0.000000e+00> : vector<8x256xf32>
    %120 = tpu.matmul %119, %118, %cst_53 {dimension_numbers = #tpu.dot_dimension_numbers<[1], [0], [0], [1], [0, 0, 1, 1], [], []>} : vector<8x64xbf16>, vector<64x256xbf16>, vector<8x256xf32> -> vector<8x256xf32>
    %121 = vector.extract_strided_slice %120 {offsets = [0, 0], sizes = [8, 128], strides = [1, 1]} : vector<8x256xf32> to vector<8x128xf32>
    %122 = vector.extract_strided_slice %120 {offsets = [0, 128], sizes = [8, 128], strides = [1, 1]} : vector<8x256xf32> to vector<8x128xf32>
    %cst_54 = arith.constant 5.000000e-01 : f32
    %123 = vector.broadcast %cst_54 : f32 to vector<8x128xf32>
    %124 = arith.mulf %123, %121 : vector<8x128xf32>
    %125 = math.tanh %124 : vector<8x128xf32>
    %cst_55 = arith.constant 1.000000e+00 : f32
    %126 = vector.broadcast %cst_55 : f32 to vector<8x128xf32>
    %127 = arith.addf %125, %126 : vector<8x128xf32>
    %cst_56 = arith.constant 5.000000e-01 : f32
    %128 = vector.broadcast %cst_56 : f32 to vector<8x128xf32>
    %129 = arith.mulf %128, %127 : vector<8x128xf32>
    %130 = arith.mulf %121, %129 : vector<8x128xf32>
    %131 = arith.mulf %130, %122 : vector<8x128xf32>
    %c0_57 = arith.constant 0 : index
    %c0_58 = arith.constant 0 : index
    %c0_59 = arith.constant 0 : index
    %132 = vector.load %arg15[%c0_57, %c0_58, %c0_59] : memref<1x128x64xbf16, #tpu.memory_space<vmem>>, vector<1x128x64xbf16>
    %133 = vector.shape_cast %132 : vector<1x128x64xbf16> to vector<128x64xbf16>
    %134 = arith.truncf %131 : vector<8x128xf32> to vector<8x128xbf16>
    %cst_60 = arith.constant dense<0.000000e+00> : vector<8x64xf32>
    %135 = tpu.matmul %134, %133, %cst_60 {dimension_numbers = #tpu.dot_dimension_numbers<[1], [0], [0], [1], [0, 0, 1, 1], [], []>} : vector<8x128xbf16>, vector<128x64xbf16>, vector<8x64xf32> -> vector<8x64xf32>
    %136 = arith.addf %135, %102 : vector<8x64xf32>
    %c0_61 = arith.constant 0 : index
    %c0_62 = arith.constant 0 : index
    %137 = vector.load %arg17[%c0_61, %c0_62] : memref<8x64xf32, #tpu.memory_space<vmem>>, vector<8x64xf32>
    tpu.vector_store %arg17[%c0_61, %c0_62], %136 {strides = array<i32>} : memref<8x64xf32, #tpu.memory_space<vmem>>, vector<8x64xf32>,
    %c1_i32 = arith.constant 1 : i32
    %138 = arith.cmpi eq, %arg0, %c1_i32 : i32
    %139 = arith.extui %138 : i1 to i32
    %c0_i32_63 = arith.constant 0 : i32
    %140 = arith.cmpi ne, %139, %c0_i32_63 : i32
    scf.if %140 {
      %c0_64 = arith.constant 0 : index
      %c0_65 = arith.constant 0 : index
      %141 = vector.load %arg7[%c0_64, %c0_65] : memref<1x64xf32, #tpu.memory_space<vmem>>, vector<1x64xf32>
      %142 = arith.mulf %136, %136 : vector<8x64xf32>
      %cst_66 = arith.constant dense<0.000000e+00> : vector<8xf32>
      %143 = vector.multi_reduction <add>, %142, %cst_66 [1] : vector<8x64xf32> to vector<8xf32>
      %144 = vector.shape_cast %143 : vector<8xf32> to vector<8x1xf32>
      %cst_67 = arith.constant 6.400000e+01 : f32
      %145 = vector.broadcast %cst_67 : f32 to vector<8x1xf32>
      %146 = arith.divf %144, %145 : vector<8x1xf32>
      %cst_68 = arith.constant 9.99999974E-6 : f32
      %147 = vector.broadcast %cst_68 : f32 to vector<8x1xf32>
      %148 = arith.addf %146, %147 : vector<8x1xf32>
      %149 = math.rsqrt %148 : vector<8x1xf32>
      %150 = vector.broadcast %149 : vector<8x1xf32> to vector<8x64xf32>
      %151 = arith.mulf %136, %150 : vector<8x64xf32>
      %152 = vector.broadcast %141 : vector<1x64xf32> to vector<8x64xf32>
      %153 = arith.mulf %151, %152 : vector<8x64xf32>
      %c0_69 = arith.constant 0 : index
      %c0_70 = arith.constant 0 : index
      %154 = vector.load %arg16[%c0_69, %c0_70] : memref<8x64xf32, #tpu.memory_space<vmem>>, vector<8x64xf32>
      tpu.vector_store %arg16[%c0_69, %c0_70], %153 {strides = array<i32>} : memref<8x64xf32, #tpu.memory_space<vmem>>, vector<8x64xf32>,
    } else {
    }
    return
  }
  func.func @transform_0(%arg0: i32) -> (i32, i32) {
    %c0_i32 = arith.constant 0 : i32
    %c0_i32_0 = arith.constant 0 : i32
    %c0_i32_1 = arith.constant 0 : i32
    return %c0_i32, %c0_i32_0 : i32, i32
  }
  func.func @transform_1(%arg0: i32) -> (i32, i32) {
    %c0_i32 = arith.constant 0 : i32
    %c0_i32_0 = arith.constant 0 : i32
    %c0_i32_1 = arith.constant 0 : i32
    return %c0_i32, %c0_i32_0 : i32, i32
  }
  func.func @transform_2(%arg0: i32) -> (i32, i32) {
    %c0_i32 = arith.constant 0 : i32
    %c0_i32_0 = arith.constant 0 : i32
    %c0_i32_1 = arith.constant 0 : i32
    return %c0_i32, %c0_i32_0 : i32, i32
  }
  func.func @transform_3(%arg0: i32) -> (i32, i32) {
    %c0_i32 = arith.constant 0 : i32
    %c0_i32_0 = arith.constant 0 : i32
    %c0_i32_1 = arith.constant 0 : i32
    return %c0_i32, %c0_i32_0 : i32, i32
  }
  func.func @transform_4(%arg0: i32) -> (i32, i32) {
    %c0_i32 = arith.constant 0 : i32
    %c0_i32_0 = arith.constant 0 : i32
    %c0_i32_1 = arith.constant 0 : i32
    return %c0_i32, %c0_i32_0 : i32, i32
  }
  func.func @transform_5(%arg0: i32) -> (i32, i32) {
    %c0_i32 = arith.constant 0 : i32
    %c0_i32_0 = arith.constant 0 : i32
    %c0_i32_1 = arith.constant 0 : i32
    return %c0_i32, %c0_i32_0 : i32, i32
  }
  func.func @transform_6(%arg0: i32) -> (i32, i32) {
    %c0_i32 = arith.constant 0 : i32
    %c0_i32_0 = arith.constant 0 : i32
    %c0_i32_1 = arith.constant 0 : i32
    return %c0_i32, %c0_i32_0 : i32, i32
  }
  func.func @transform_7(%arg0: i32) -> (i32, i32, i32) {
    %c0_i32 = arith.constant 0 : i32
    %c0_i32_0 = arith.constant 0 : i32
    %c0_i32_1 = arith.constant 0 : i32
    return %arg0, %c0_i32, %c0_i32_0 : i32, i32, i32
  }
  func.func @transform_8(%arg0: i32) -> (i32, i32, i32) {
    %c0_i32 = arith.constant 0 : i32
    %c0_i32_0 = arith.constant 0 : i32
    %c0_i32_1 = arith.constant 0 : i32
    return %arg0, %c0_i32, %c0_i32_0 : i32, i32, i32
  }
  func.func @transform_9(%arg0: i32) -> (i32, i32, i32) {
    %c0_i32 = arith.constant 0 : i32
    %c0_i32_0 = arith.constant 0 : i32
    %c0_i32_1 = arith.constant 0 : i32
    return %arg0, %c0_i32, %c0_i32_0 : i32, i32, i32
  }
  func.func @transform_10(%arg0: i32) -> (i32, i32, i32) {
    %c0_i32 = arith.constant 0 : i32
    %c0_i32_0 = arith.constant 0 : i32
    %c0_i32_1 = arith.constant 0 : i32
    return %arg0, %c0_i32, %c0_i32_0 : i32, i32, i32
  }
  func.func @transform_11(%arg0: i32) -> (i32, i32, i32) {
    %c0_i32 = arith.constant 0 : i32
    %c0_i32_0 = arith.constant 0 : i32
    %c0_i32_1 = arith.constant 0 : i32
    return %arg0, %c0_i32, %c0_i32_0 : i32, i32, i32
  }
  func.func @transform_12(%arg0: i32) -> (i32, i32, i32) {
    %c0_i32 = arith.constant 0 : i32
    %c0_i32_0 = arith.constant 0 : i32
    %c0_i32_1 = arith.constant 0 : i32
    return %arg0, %c0_i32, %c0_i32_0 : i32, i32, i32
  }
  func.func @transform_13(%arg0: i32) -> (i32, i32, i32) {
    %c0_i32 = arith.constant 0 : i32
    %c0_i32_0 = arith.constant 0 : i32
    %c0_i32_1 = arith.constant 0 : i32
    return %arg0, %c0_i32, %c0_i32_0 : i32, i32, i32
  }
  func.func @transform_14(%arg0: i32) -> (i32, i32, i32) {
    %c0_i32 = arith.constant 0 : i32
    %c0_i32_0 = arith.constant 0 : i32
    %c0_i32_1 = arith.constant 0 : i32
    return %arg0, %c0_i32, %c0_i32_0 : i32, i32, i32
  }
  func.func @transform_15(%arg0: i32) -> (i32, i32) {
    %c0_i32 = arith.constant 0 : i32
    %c0_i32_0 = arith.constant 0 : i32
    %c0_i32_1 = arith.constant 0 : i32
    return %c0_i32, %c0_i32_0 : i32, i32
  }
}

</mosaic_0001>

<llo_original>
// kernel: tile.19
$region0: #{tile.19}
  %s0 = inlined_call_operand.vmem [shape: f32[8,6,16], index: 0, kind: input, shape index: {}]
  %s1 = inlined_call_operand.vmem [shape: f32[8,96], index: 1, kind: output, shape index: {}]
  %v2 = vld [vmem:[%s0] ss:$8 sm:$0xf]
  %v3 = vld [vmem:[%s0] ss:$8 sm:$0xf0]
  %vm4 = vcmask 1047556
  %v5 = vsel %vm4, %v3, %v2
  %vm6 = vcmask 130048
  %7 = vst.msk [vmem:[%s1] sm:$0xff] %vm6, %v5
  %s8 = scalar_lea.vmem %s0, 5
  %v9 = vld [vmem:[%s8] ss:$8 sm:$0xf]
  %s10 = scalar_lea.vmem %s0, 5
  %v11 = vld [vmem:[%s10] ss:$8 sm:$0xf0]
  %vm12 = vcmask 1047556
  %v13 = vsel %vm12, %v11, %v9
  %14 = vrot.lane.b32.xlu0 %v13, 80
  %v15 = vpop.permute.xlu0 %14
  %vm16 = vcmask 786048
  %17 = vst.msk [vmem:[%s1] sm:$0xff] %vm16, %v15
  %s18 = scalar_lea.vmem %s0, 4
  %v19 = vld [vmem:[%s18] ss:$8 sm:$0xf]
  %s20 = scalar_lea.vmem %s0, 4
  %v21 = vld [vmem:[%s20] ss:$8 sm:$0xf0]
  %vm22 = vcmask 1047556
  %v23 = vsel %vm22, %v21, %v19
  %24 = vrot.lane.b32.xlu0 %v23, 64
  %v25 = vpop.permute.xlu0 %24
  %vm26 = vcmask 654848
  %27 = vst.msk [vmem:[%s1] sm:$0xff] %vm26, %v25
  %s28 = scalar_lea.vmem %s0, 3
  %v29 = vld [vmem:[%s28] ss:$8 sm:$0xf]
  %s30 = scalar_lea.vmem %s0, 3
  %v31 = vld [vmem:[%s30] ss:$8 sm:$0xf0]
  %vm32 = vcmask 1047556
  %v33 = vsel %vm32, %v31, %v29
  %34 = vrot.lane.b32.xlu0 %v33, 48
  %v35 = vpop.permute.xlu0 %34
  %vm36 = vcmask 523648
  %37 = vst.msk [vmem:[%s1] sm:$0xff] %vm36, %v35
  %s38 = scalar_lea.vmem %s0, 2
  %v39 = vld [vmem:[%s38] ss:$8 sm:$0xf]
  %s40 = scalar_lea.vmem %s0, 2
  %v41 = vld [vmem:[%s40] ss:$8 sm:$0xf0]
  %vm42 = vcmask 1047556
  %v43 = vsel %vm42, %v41, %v39
  %44 = vrot.lane.b32.xlu0 %v43, 32
  %v45 = vpop.permute.xlu0 %44
  %vm46 = vcmask 392448
  %47 = vst.msk [vmem:[%s1] sm:$0xff] %vm46, %v45
  %s48 = scalar_lea.vmem %s0, 1
  %v49 = vld [vmem:[%s48] ss:$8 sm:$0xf]
  %s50 = scalar_lea.vmem %s0, 1
  %v51 = vld [vmem:[%s50] ss:$8 sm:$0xf0]
  %vm52 = vcmask 1047556
  %v53 = vsel %vm52, %v51, %v49
  %54 = vrot.lane.b32.xlu0 %v53, 16
  %v55 = vpop.permute.xlu0 %54
  %vm56 = vcmask 261248
  %57 = vst.msk [vmem:[%s1] sm:$0xff] %vm56, %v55

// kernel: chameleon_forward.1
$region0: #{chameleon_forward.1}
  #allocation0 [shape = 'u32[]', space=smem, size = 0x4, offset = 0x4, fixed_abs, tag = 'smem constant byte address 0x4 - core index']
  #allocation1 [shape = 'u32[72,128]{1,0:T(1,128)}', space=vmem, size = 0x9000, scoped, tag = 'internal scratch']
  #allocation2 [shape = 'f32[8,64]{1,0:T(8,128)}', space=vmem, size = 0x1000, scoped, tag = 'scratch operand']
  %s0 = inlined_call_operand.vmem [shape: f32[8,64], index: 0, kind: input, shape index: {}]
  %s1 = inlined_call_operand.vmem [shape: f32[8,128], index: 1, kind: input, shape index: {}]
  %s2 = inlined_call_operand.vmem [shape: f32[8,128], index: 2, kind: input, shape index: {}]
  %s3 = inlined_call_operand.vmem [shape: bf16[128,128], index: 3, kind: input, shape index: {}]
  %s4 = inlined_call_operand.vmem [shape: bf16[128,128], index: 4, kind: input, shape index: {}]
  %s5 = inlined_call_operand.vmem [shape: f32[16,8], index: 5, kind: input, shape index: {}]
  %s6 = inlined_call_operand.vmem [shape: f32[1,64], index: 6, kind: input, shape index: {}]
  %s7 = inlined_call_operand.vmem [shape: bf16[2,64,128], index: 7, kind: input, shape index: {}]
  %s8 = inlined_call_operand.vmem [shape: bf16[2,64,64], index: 8, kind: input, shape index: {}]
  %s9 = inlined_call_operand.vmem [shape: f32[2,1,64], index: 9, kind: input, shape index: {}]
  %s10 = inlined_call_operand.vmem [shape: f32[2,1,64], index: 10, kind: input, shape index: {}]
  %s11 = inlined_call_operand.vmem [shape: f32[2,1,128], index: 11, kind: input, shape index: {}]
  %s12 = inlined_call_operand.vmem [shape: f32[2,1,128], index: 12, kind: input, shape index: {}]
  %s13 = inlined_call_operand.vmem [shape: bf16[2,64,256], index: 13, kind: input, shape index: {}]
  %s14 = inlined_call_operand.vmem [shape: bf16[2,128,64], index: 14, kind: input, shape index: {}]
  %s15 = inlined_call_operand.hbm [shape: f32[8,64], index: 15, kind: output, shape index: {}]
  %s16 = sld [smem:[#allocation0]]
  $region101: #{chameleon_forward.1} parent=0
    _
  %s18 = ssub.s32 1, %s16
  %s19 = scalar_select 0, %s18, %s16
  $region1: #{chameleon_forward.1} parent=0
    #allocation3 [shape = 'u8[4096]{0}', space=vmem, size = 0x1000, scoped, tag = 'output window, operand 0, single buffered']
    #allocation4 [shape = 's32[2]{0}', space=sflag, size = 0x8, scoped, tag = 'scoped memory for chameleon_forward.1']
    %20 = vsyncpa [#allocation4], 0
    loop: start=0, step=1, limit=4
    $region2: #{chameleon_forward.1} parent=1 // loop_pre_header
      _
    $region3: #{chameleon_forward.1} parent=1 // loop_header
      %s22 = sphi 0, %s26
      %p23 = scmp.ge.s32.totalorder %s22, 4
      %s30 = sphi 0, %s30
      %s32 = sphi 0, %s30
      %s33 = sphi 0, %s32
      %s47 = sphi 0, %s33
      %s51 = sphi 0, %s51
      %s53 = sphi 0, %s51
      %s54 = sphi 0, %s53
      %s68 = sphi 0, %s54
      %s72 = sphi 0, %s72
      %s74 = sphi 0, %s72
      %s75 = sphi 0, %s74
      %s89 = sphi 0, %s75
      %s93 = sphi 0, %s93
      %s95 = sphi 0, %s93
      %s96 = sphi 0, %s95
      %s110 = sphi 0, %s96
      %s114 = sphi 0, %s114
      %s116 = sphi 0, %s114
      %s117 = sphi 0, %s116
      %s131 = sphi 0, %s117
      %s135 = sphi 0, %s135
      %s137 = sphi 0, %s135
      %s138 = sphi 0, %s137
      %s152 = sphi 0, %s138
      %s156 = sphi 0, %s156
      %s158 = sphi 0, %s156
      %s159 = sphi 0, %s158
      %s173 = sphi 0, %s159
      %s179 = sphi 0, %s181
      %s182 = sphi 0, %s179
      %s183 = sphi 0, %s182
      %s199 = sphi 0, %s183
      %s205 = sphi 0, %s207
      %s208 = sphi 0, %s205
      %s209 = sphi 0, %s208
      %s225 = sphi 0, %s209
      %s231 = sphi 0, %s233
      %s234 = sphi 0, %s231
      %s235 = sphi 0, %s234
      %s251 = sphi 0, %s235
      %s257 = sphi 0, %s259
      %s260 = sphi 0, %s257
      %s261 = sphi 0, %s260
      %s277 = sphi 0, %s261
      %s283 = sphi 0, %s285
      %s286 = sphi 0, %s283
      %s287 = sphi 0, %s286
      %s303 = sphi 0, %s287
      %s309 = sphi 0, %s311
      %s312 = sphi 0, %s309
      %s313 = sphi 0, %s312
      %s329 = sphi 0, %s313
      %s335 = sphi 0, %s337
      %s338 = sphi 0, %s335
      %s339 = sphi 0, %s338
      %s355 = sphi 0, %s339
      %s361 = sphi 0, %s363
      %s364 = sphi 0, %s361
      %s365 = sphi 0, %s364
      %s381 = sphi 0, %s365
      %s385 = sphi 0, %s385
      %s387 = sphi 0, %s385
      %s388 = sphi 0, %s387
      %s402 = sphi 0, %s388
    $region4: #{chameleon_forward.1} parent=1 // loop_header_branch
      %25 = sbr.rel (%p23) target = $region8
    $region5: #{chameleon_forward.1} parent=1 // loop_body
      %s27 = ssub.s32 %s22, 1
      %s28 = ssub.s32 %s22, 2
      %s29 = sadd.s32 %s22, 1
      %s31 = sadd.s32 %s30, 1
      %p34 = scmp.eq.s32.totalorder %s22, 1
      %p35 = scmp.ne.s32.totalorder %s30, %s32
      %p36 = scmp.eq.s32.totalorder %s22, 0
      %p37 = por %p35, %p36
      %p38 = scmp.ne.s32.totalorder %s30, %s32
      %p39 = scmp.eq.s32.totalorder %s27, 1
      %p40 = por %p38, %p39
      %p41 = scmp.ne.s32.totalorder %s32, %s33
      %p42 = scmp.eq.s32.totalorder %s27, 0
      %p43 = por %p41, %p42
      %p44 = scmp.ne.s32.totalorder %s32, %s33
      %p45 = scmp.eq.s32.totalorder %s28, 1
      %p46 = por %p44, %p45
      %p48 = scmp.ne.s32.totalorder %s33, %s47
      %p49 = scmp.eq.s32.totalorder %s28, 0
      %p50 = por %p48, %p49
      %s52 = sadd.s32 %s51, 1
      %p55 = scmp.eq.s32.totalorder %s22, 1
      %p56 = scmp.ne.s32.totalorder %s51, %s53
      %p57 = scmp.eq.s32.totalorder %s22, 0
      %p58 = por %p56, %p57
      %p59 = scmp.ne.s32.totalorder %s51, %s53
      %p60 = scmp.eq.s32.totalorder %s27, 1
      %p61 = por %p59, %p60
      %p62 = scmp.ne.s32.totalorder %s53, %s54
      %p63 = scmp.eq.s32.totalorder %s27, 0
      %p64 = por %p62, %p63
      %p65 = scmp.ne.s32.totalorder %s53, %s54
      %p66 = scmp.eq.s32.totalorder %s28, 1
      %p67 = por %p65, %p66
      %p69 = scmp.ne.s32.totalorder %s54, %s68
      %p70 = scmp.eq.s32.totalorder %s28, 0
      %p71 = por %p69, %p70
      %s73 = sadd.s32 %s72, 1
      %p76 = scmp.eq.s32.totalorder %s22, 1
      %p77 = scmp.ne.s32.totalorder %s72, %s74
      %p78 = scmp.eq.s32.totalorder %s22, 0
      %p79 = por %p77, %p78
      %p80 = scmp.ne.s32.totalorder %s72, %s74
      %p81 = scmp.eq.s32.totalorder %s27, 1
      %p82 = por %p80, %p81
      %p83 = scmp.ne.s32.totalorder %s74, %s75
      %p84 = scmp.eq.s32.totalorder %s27, 0
      %p85 = por %p83, %p84
      %p86 = scmp.ne.s32.totalorder %s74, %s75
      %p87 = scmp.eq.s32.totalorder %s28, 1
      %p88 = por %p86, %p87
      %p90 = scmp.ne.s32.totalorder %s75, %s89
      %p91 = scmp.eq.s32.totalorder %s28, 0
      %p92 = por %p90, %p91
      %s94 = sadd.s32 %s93, 1
      %p97 = scmp.eq.s32.totalorder %s22, 1
      %p98 = scmp.ne.s32.totalorder %s93, %s95
      %p99 = scmp.eq.s32.totalorder %s22, 0
      %p100 = por %p98, %p99
      %p101 = scmp.ne.s32.totalorder %s93, %s95
      %p102 = scmp.eq.s32.totalorder %s27, 1
      %p103 = por %p101, %p102
      %p104 = scmp.ne.s32.totalorder %s95, %s96
      %p105 = scmp.eq.s32.totalorder %s27, 0
      %p106 = por %p104, %p105
      %p107 = scmp.ne.s32.totalorder %s95, %s96
      %p108 = scmp.eq.s32.totalorder %s28, 1
      %p109 = por %p107, %p108
      %p111 = scmp.ne.s32.totalorder %s96, %s110
      %p112 = scmp.eq.s32.totalorder %s28, 0
      %p113 = por %p111, %p112
      %s115 = sadd.s32 %s114, 1
      %p118 = scmp.eq.s32.totalorder %s22, 1
      %p119 = scmp.ne.s32.totalorder %s114, %s116
      %p120 = scmp.eq.s32.totalorder %s22, 0
      %p121 = por %p119, %p120
      %p122 = scmp.ne.s32.totalorder %s114, %s116
      %p123 = scmp.eq.s32.totalorder %s27, 1
      %p124 = por %p122, %p123
      %p125 = scmp.ne.s32.totalorder %s116, %s117
      %p126 = scmp.eq.s32.totalorder %s27, 0
      %p127 = por %p125, %p126
      %p128 = scmp.ne.s32.totalorder %s116, %s117
      %p129 = scmp.eq.s32.totalorder %s28, 1
      %p130 = por %p128, %p129
      %p132 = scmp.ne.s32.totalorder %s117, %s131
      %p133 = scmp.eq.s32.totalorder %s28, 0
      %p134 = por %p132, %p133
      %s136 = sadd.s32 %s135, 1
      %p139 = scmp.eq.s32.totalorder %s22, 1
      %p140 = scmp.ne.s32.totalorder %s135, %s137
      %p141 = scmp.eq.s32.totalorder %s22, 0
      %p142 = por %p140, %p141
      %p143 = scmp.ne.s32.totalorder %s135, %s137
      %p144 = scmp.eq.s32.totalorder %s27, 1
      %p145 = por %p143, %p144
      %p146 = scmp.ne.s32.totalorder %s137, %s138
      %p147 = scmp.eq.s32.totalorder %s27, 0
      %p148 = por %p146, %p147
      %p149 = scmp.ne.s32.totalorder %s137, %s138
      %p150 = scmp.eq.s32.totalorder %s28, 1
      %p151 = por %p149, %p150
      %p153 = scmp.ne.s32.totalorder %s138, %s152
      %p154 = scmp.eq.s32.totalorder %s28, 0
      %p155 = por %p153, %p154
      %s157 = sadd.s32 %s156, 1
      %p160 = scmp.eq.s32.totalorder %s22, 1
      %p161 = scmp.ne.s32.totalorder %s156, %s158
      %p162 = scmp.eq.s32.totalorder %s22, 0
      %p163 = por %p161, %p162
      %p164 = scmp.ne.s32.totalorder %s156, %s158
      %p165 = scmp.eq.s32.totalorder %s27, 1
      %p166 = por %p164, %p165
      %p167 = scmp.ne.s32.totalorder %s158, %s159
      %p168 = scmp.eq.s32.totalorder %s27, 0
      %p169 = por %p167, %p168
      %p170 = scmp.ne.s32.totalorder %s158, %s159
      %p171 = scmp.eq.s32.totalorder %s28, 1
      %p172 = por %p170, %p171
      %p174 = scmp.ne.s32.totalorder %s159, %s173
      %p175 = scmp.eq.s32.totalorder %s28, 0
      %p176 = por %p174, %p175
      %s177 = ssub.s32 %s22, %s29
      %p178 = scmp.eq.s32.totalorder %s177, 0
      %s180 = sadd.s32 %s179, 1
      %s181 = scalar_select %p178, %s179, %s180
      %p184 = pneg %p178
      %p185 = scmp.eq.s32.totalorder %s22, 1
      %p186 = por %p184, %p185
      %p187 = scmp.ne.s32.totalorder %s179, %s182
      %p188 = scmp.eq.s32.totalorder %s22, 0
      %p189 = por %p187, %p188
      %p190 = scmp.ne.s32.totalorder %s179, %s182
      %p191 = scmp.eq.s32.totalorder %s27, 1
      %p192 = por %p190, %p191
      %p193 = scmp.ne.s32.totalorder %s182, %s183
      %p194 = scmp.eq.s32.totalorder %s27, 0
      %p195 = por %p193, %p194
      %p196 = scmp.ne.s32.totalorder %s182, %s183
      %p197 = scmp.eq.s32.totalorder %s28, 1
      %p198 = por %p196, %p197
      %p200 = scmp.ne.s32.totalorder %s183, %s199
      %p201 = scmp.eq.s32.totalorder %s28, 0
      %p202 = por %p200, %p201
      %s203 = ssub.s32 %s22, %s29
      %p204 = scmp.eq.s32.totalorder %s203, 0
      %s206 = sadd.s32 %s205, 1
      %s207 = scalar_select %p204, %s205, %s206
      %p210 = pneg %p204
      %p211 = scmp.eq.s32.totalorder %s22, 1
      %p212 = por %p210, %p211
      %p213 = scmp.ne.s32.totalorder %s205, %s208
      %p214 = scmp.eq.s32.totalorder %s22, 0
      %p215 = por %p213, %p214
      %p216 = scmp.ne.s32.totalorder %s205, %s208
      %p217 = scmp.eq.s32.totalorder %s27, 1
      %p218 = por %p216, %p217
      %p219 = scmp.ne.s32.totalorder %s208, %s209
      %p220 = scmp.eq.s32.totalorder %s27, 0
      %p221 = por %p219, %p220
      %p222 = scmp.ne.s32.totalorder %s208, %s209
      %p223 = scmp.eq.s32.totalorder %s28, 1
      %p224 = por %p222, %p223
      %p226 = scmp.ne.s32.totalorder %s209, %s225
      %p227 = scmp.eq.s32.totalorder %s28, 0
      %p228 = por %p226, %p227
      %s229 = ssub.s32 %s22, %s29
      %p230 = scmp.eq.s32.totalorder %s229, 0
      %s232 = sadd.s32 %s231, 1
      %s233 = scalar_select %p230, %s231, %s232
      %p236 = pneg %p230
      %p237 = scmp.eq.s32.totalorder %s22, 1
      %p238 = por %p236, %p237
      %p239 = scmp.ne.s32.totalorder %s231, %s234
      %p240 = scmp.eq.s32.totalorder %s22, 0
      %p241 = por %p239, %p240
      %p242 = scmp.ne.s32.totalorder %s231, %s234
      %p243 = scmp.eq.s32.totalorder %s27, 1
      %p244 = por %p242, %p243
      %p245 = scmp.ne.s32.totalorder %s234, %s235
      %p246 = scmp.eq.s32.totalorder %s27, 0
      %p247 = por %p245, %p246
      %p248 = scmp.ne.s32.totalorder %s234, %s235
      %p249 = scmp.eq.s32.totalorder %s28, 1
      %p250 = por %p248, %p249
      %p252 = scmp.ne.s32.totalorder %s235, %s251
      %p253 = scmp.eq.s32.totalorder %s28, 0
      %p254 = por %p252, %p253
      %s255 = ssub.s32 %s22, %s29
      %p256 = scmp.eq.s32.totalorder %s255, 0
      %s258 = sadd.s32 %s257, 1
      %s259 = scalar_select %p256, %s257, %s258
      %p262 = pneg %p256
      %p263 = scmp.eq.s32.totalorder %s22, 1
      %p264 = por %p262, %p263
      %p265 = scmp.ne.s32.totalorder %s257, %s260
      %p266 = scmp.eq.s32.totalorder %s22, 0
      %p267 = por %p265, %p266
      %p268 = scmp.ne.s32.totalorder %s257, %s260
      %p269 = scmp.eq.s32.totalorder %s27, 1
      %p270 = por %p268, %p269
      %p271 = scmp.ne.s32.totalorder %s260, %s261
      %p272 = scmp.eq.s32.totalorder %s27, 0
      %p273 = por %p271, %p272
      %p274 = scmp.ne.s32.totalorder %s260, %s261
      %p275 = scmp.eq.s32.totalorder %s28, 1
      %p276 = por %p274, %p275
      %p278 = scmp.ne.s32.totalorder %s261, %s277
      %p279 = scmp.eq.s32.totalorder %s28, 0
      %p280 = por %p278, %p279
      %s281 = ssub.s32 %s22, %s29
      %p282 = scmp.eq.s32.totalorder %s281, 0
      %s284 = sadd.s32 %s283, 1
      %s285 = scalar_select %p282, %s283, %s284
      %p288 = pneg %p282
      %p289 = scmp.eq.s32.totalorder %s22, 1
      %p290 = por %p288, %p289
      %p291 = scmp.ne.s32.totalorder %s283, %s286
      %p292 = scmp.eq.s32.totalorder %s22, 0
      %p293 = por %p291, %p292
      %p294 = scmp.ne.s32.totalorder %s283, %s286
      %p295 = scmp.eq.s32.totalorder %s27, 1
      %p296 = por %p294, %p295
      %p297 = scmp.ne.s32.totalorder %s286, %s287
      %p298 = scmp.eq.s32.totalorder %s27, 0
      %p299 = por %p297, %p298
      %p300 = scmp.ne.s32.totalorder %s286, %s287
      %p301 = scmp.eq.s32.totalorder %s28, 1
      %p302 = por %p300, %p301
      %p304 = scmp.ne.s32.totalorder %s287, %s303
      %p305 = scmp.eq.s32.totalorder %s28, 0
      %p306 = por %p304, %p305
      %s307 = ssub.s32 %s22, %s29
      %p308 = scmp.eq.s32.totalorder %s307, 0
      %s310 = sadd.s32 %s309, 1
      %s311 = scalar_select %p308, %s309, %s310
      %p314 = pneg %p308
      %p315 = scmp.eq.s32.totalorder %s22, 1
      %p316 = por %p314, %p315
      %p317 = scmp.ne.s32.totalorder %s309, %s312
      %p318 = scmp.eq.s32.totalorder %s22, 0
      %p319 = por %p317, %p318
      %p320 = scmp.ne.s32.totalorder %s309, %s312
      %p321 = scmp.eq.s32.totalorder %s27, 1
      %p322 = por %p320, %p321
      %p323 = scmp.ne.s32.totalorder %s312, %s313
      %p324 = scmp.eq.s32.totalorder %s27, 0
      %p325 = por %p323, %p324
      %p326 = scmp.ne.s32.totalorder %s312, %s313
      %p327 = scmp.eq.s32.totalorder %s28, 1
      %p328 = por %p326, %p327
      %p330 = scmp.ne.s32.totalorder %s313, %s329
      %p331 = scmp.eq.s32.totalorder %s28, 0
      %p332 = por %p330, %p331
      %s333 = ssub.s32 %s22, %s29
      %p334 = scmp.eq.s32.totalorder %s333, 0
      %s336 = sadd.s32 %s335, 1
      %s337 = scalar_select %p334, %s335, %s336
      %p340 = pneg %p334
      %p341 = scmp.eq.s32.totalorder %s22, 1
      %p342 = por %p340, %p341
      %p343 = scmp.ne.s32.totalorder %s335, %s338
      %p344 = scmp.eq.s32.totalorder %s22, 0
      %p345 = por %p343, %p344
      %p346 = scmp.ne.s32.totalorder %s335, %s338
      %p347 = scmp.eq.s32.totalorder %s27, 1
      %p348 = por %p346, %p347
      %p349 = scmp.ne.s32.totalorder %s338, %s339
      %p350 = scmp.eq.s32.totalorder %s27, 0
      %p351 = por %p349, %p350
      %p352 = scmp.ne.s32.totalorder %s338, %s339
      %p353 = scmp.eq.s32.totalorder %s28, 1
      %p354 = por %p352, %p353
      %p356 = scmp.ne.s32.totalorder %s339, %s355
      %p357 = scmp.eq.s32.totalorder %s28, 0
      %p358 = por %p356, %p357
      %s359 = ssub.s32 %s22, %s29
      %p360 = scmp.eq.s32.totalorder %s359, 0
      %s362 = sadd.s32 %s361, 1
      %s363 = scalar_select %p360, %s361, %s362
      %p366 = pneg %p360
      %p367 = scmp.eq.s32.totalorder %s22, 1
      %p368 = por %p366, %p367
      %p369 = scmp.ne.s32.totalorder %s361, %s364
      %p370 = scmp.eq.s32.totalorder %s22, 0
      %p371 = por %p369, %p370
      %p372 = scmp.ne.s32.totalorder %s361, %s364
      %p373 = scmp.eq.s32.totalorder %s27, 1
      %p374 = por %p372, %p373
      %p375 = scmp.ne.s32.totalorder %s364, %s365
      %p376 = scmp.eq.s32.totalorder %s27, 0
      %p377 = por %p375, %p376
      %p378 = scmp.ne.s32.totalorder %s364, %s365
      %p379 = scmp.eq.s32.totalorder %s28, 1
      %p380 = por %p378, %p379
      %p382 = scmp.ne.s32.totalorder %s365, %s381
      %p383 = scmp.eq.s32.totalorder %s28, 0
      %p384 = por %p382, %p383
      %s386 = sadd.s32 %s385, 1
      %p389 = scmp.eq.s32.totalorder %s22, 1
      %p390 = scmp.ne.s32.totalorder %s385, %s387
      %p391 = scmp.eq.s32.totalorder %s22, 0
      %p392 = por %p390, %p391
      %p393 = scmp.ne.s32.totalorder %s385, %s387
      %p394 = scmp.eq.s32.totalorder %s27, 1
      %p395 = por %p393, %p394
      %p396 = scmp.ne.s32.totalorder %s387, %s388
      %p397 = scmp.eq.s32.totalorder %s27, 0
      %p398 = por %p396, %p397
      %p399 = scmp.ne.s32.totalorder %s387, %s388
      %p400 = scmp.eq.s32.totalorder %s28, 1
      %p401 = por %p399, %p400
      %p403 = scmp.ne.s32.totalorder %s388, %s402
      %p404 = scmp.eq.s32.totalorder %s28, 0
      %p405 = por %p403, %p404
      %p406 = scmp.le.s32.totalorder 1, %s22
      %p407 = scmp.lt.s32.totalorder %s22, 3
      %p408 = pnand %p406, %p407
      %p409 = pneg %p408
      // Predicated region
      $region9: #{chameleon_forward.1} parent=5 // pred_check
        _
      $region10: #{chameleon_forward.1} parent=5 // pred_check_branch
        %411 = sbr.rel (%p408) target = $region12
      $region11: #{chameleon_forward.1} parent=5 // pred_region
        %s412 = ssub.s32 %s22, 1
        // Predicated region
        $region13: #{chameleon_forward.1} parent=11 // pred_check
          %p413 = pneg %p43
        $region14: #{chameleon_forward.1} parent=11 // pred_check_branch
          %415 = sbr.rel (%p413) target = $region16
        $region15: #{chameleon_forward.1} parent=11 // pred_region
          _
        $region16: #{chameleon_forward.1} parent=11 // pred_fallthru
          _
        // Predicated region
        $region17: #{chameleon_forward.1} parent=11 // pred_check
          %p416 = pneg %p64
        $region18: #{chameleon_forward.1} parent=11 // pred_check_branch
          %418 = sbr.rel (%p416) target = $region20
        $region19: #{chameleon_forward.1} parent=11 // pred_region
          _
        $region20: #{chameleon_forward.1} parent=11 // pred_fallthru
          _
        // Predicated region
        $region21: #{chameleon_forward.1} parent=11 // pred_check
          %p419 = pneg %p85
        $region22: #{chameleon_forward.1} parent=11 // pred_check_branch
          %421 = sbr.rel (%p419) target = $region24
        $region23: #{chameleon_forward.1} parent=11 // pred_region
          _
        $region24: #{chameleon_forward.1} parent=11 // pred_fallthru
          _
        // Predicated region
        $region25: #{chameleon_forward.1} parent=11 // pred_check
          %p422 = pneg %p106
        $region26: #{chameleon_forward.1} parent=11 // pred_check_branch
          %424 = sbr.rel (%p422) target = $region28
        $region27: #{chameleon_forward.1} parent=11 // pred_region
          _
        $region28: #{chameleon_forward.1} parent=11 // pred_fallthru
          _
        // Predicated region
        $region29: #{chameleon_forward.1} parent=11 // pred_check
          %p425 = pneg %p127
        $region30: #{chameleon_forward.1} parent=11 // pred_check_branch
          %427 = sbr.rel (%p425) target = $region32
        $region31: #{chameleon_forward.1} parent=11 // pred_region
          _
        $region32: #{chameleon_forward.1} parent=11 // pred_fallthru
          _
        // Predicated region
        $region33: #{chameleon_forward.1} parent=11 // pred_check
          %p428 = pneg %p148
        $region34: #{chameleon_forward.1} parent=11 // pred_check_branch
          %430 = sbr.rel (%p428) target = $region36
        $region35: #{chameleon_forward.1} parent=11 // pred_region
          _
        $region36: #{chameleon_forward.1} parent=11 // pred_fallthru
          _
        // Predicated region
        $region37: #{chameleon_forward.1} parent=11 // pred_check
          %p431 = pneg %p169
        $region38: #{chameleon_forward.1} parent=11 // pred_check_branch
          %433 = sbr.rel (%p431) target = $region40
        $region39: #{chameleon_forward.1} parent=11 // pred_region
          _
        $region40: #{chameleon_forward.1} parent=11 // pred_fallthru
          _
      $region12: #{chameleon_forward.1} parent=5 // pred_fallthru
        _
      %p434 = scmp.lt.s32.totalorder %s22, 2
      // Predicated region
      $region41: #{chameleon_forward.1} parent=5 // pred_check
        %p435 = pneg %p434
      $region42: #{chameleon_forward.1} parent=5 // pred_check_branch
        %437 = sbr.rel (%p435) target = $region44
      $region43: #{chameleon_forward.1} parent=5 // pred_region
        // Predicated region
        $region45: #{chameleon_forward.1} parent=43 // pred_check
          %p438 = pneg %p189
        $region46: #{chameleon_forward.1} parent=43 // pred_check_branch
          %440 = sbr.rel (%p438) target = $region48
        $region47: #{chameleon_forward.1} parent=43 // pred_region
          %p441 = scmp.lt.s32.totalorder %s22, 1
          %s442 = scalar_select %p441, %s22, 1
          %s443 = smul.addr %s442, 8
          %s444 = smul.addr %s443, 4
          %s445 = scalar_lea.vmem %s7, %s444
        $region48: #{chameleon_forward.1} parent=43 // pred_fallthru
          _
        // Predicated region
        $region49: #{chameleon_forward.1} parent=43 // pred_check
          %p446 = pneg %p215
        $region50: #{chameleon_forward.1} parent=43 // pred_check_branch
          %448 = sbr.rel (%p446) target = $region52
        $region51: #{chameleon_forward.1} parent=43 // pred_region
          %p449 = scmp.lt.s32.totalorder %s22, 1
          %s450 = scalar_select %p449, %s22, 1
          %s451 = smul.addr %s450, 8
          %s452 = smul.addr %s451, 4
          %s453 = scalar_lea.vmem %s8, %s452
        $region52: #{chameleon_forward.1} parent=43 // pred_fallthru
          _
        // Predicated region
        $region53: #{chameleon_forward.1} parent=43 // pred_check
          %p454 = pneg %p241
        $region54: #{chameleon_forward.1} parent=43 // pred_check_branch
          %456 = sbr.rel (%p454) target = $region56
        $region55: #{chameleon_forward.1} parent=43 // pred_region
          %p457 = scmp.lt.s32.totalorder %s22, 1
          %s458 = scalar_select %p457, %s22, 1
          %s459 = scalar_lea.vmem %s9, %s458
        $region56: #{chameleon_forward.1} parent=43 // pred_fallthru
          _
        // Predicated region
        $region57: #{chameleon_forward.1} parent=43 // pred_check
          %p460 = pneg %p267
        $region58: #{chameleon_forward.1} parent=43 // pred_check_branch
          %462 = sbr.rel (%p460) target = $region60
        $region59: #{chameleon_forward.1} parent=43 // pred_region
          %p463 = scmp.lt.s32.totalorder %s22, 1
          %s464 = scalar_select %p463, %s22, 1
          %s465 = scalar_lea.vmem %s10, %s464
        $region60: #{chameleon_forward.1} parent=43 // pred_fallthru
          _
        // Predicated region
        $region61: #{chameleon_forward.1} parent=43 // pred_check
          %p466 = pneg %p293
        $region62: #{chameleon_forward.1} parent=43 // pred_check_branch
          %468 = sbr.rel (%p466) target = $region64
        $region63: #{chameleon_forward.1} parent=43 // pred_region
          %p469 = scmp.lt.s32.totalorder %s22, 1
          %s470 = scalar_select %p469, %s22, 1
          %s471 = scalar_lea.vmem %s11, %s470
        $region64: #{chameleon_forward.1} parent=43 // pred_fallthru
          _
        // Predicated region
        $region65: #{chameleon_forward.1} parent=43 // pred_check
          %p472 = pneg %p319
        $region66: #{chameleon_forward.1} parent=43 // pred_check_branch
          %474 = sbr.rel (%p472) target = $region68
        $region67: #{chameleon_forward.1} parent=43 // pred_region
          %p475 = scmp.lt.s32.totalorder %s22, 1
          %s476 = scalar_select %p475, %s22, 1
          %s477 = scalar_lea.vmem %s12, %s476
        $region68: #{chameleon_forward.1} parent=43 // pred_fallthru
          _
        // Predicated region
        $region69: #{chameleon_forward.1} parent=43 // pred_check
          %p478 = pneg %p345
        $region70: #{chameleon_forward.1} parent=43 // pred_check_branch
          %480 = sbr.rel (%p478) target = $region72
        $region71: #{chameleon_forward.1} parent=43 // pred_region
          %p481 = scmp.lt.s32.totalorder %s22, 1
          %s482 = scalar_select %p481, %s22, 1
          %s483 = smul.addr %s482, 16
          %s484 = smul.addr %s483, 4
          %s485 = scalar_lea.vmem %s13, %s484
        $region72: #{chameleon_forward.1} parent=43 // pred_fallthru
          _
        // Predicated region
        $region73: #{chameleon_forward.1} parent=43 // pred_check
          %p486 = pneg %p371
        $region74: #{chameleon_forward.1} parent=43 // pred_check_branch
          %488 = sbr.rel (%p486) target = $region76
        $region75: #{chameleon_forward.1} parent=43 // pred_region
          %p489 = scmp.lt.s32.totalorder %s22, 1
          %s490 = scalar_select %p489, %s22, 1
          %s491 = smul.addr %s490, 16
          %s492 = smul.addr %s491, 4
          %s493 = scalar_lea.vmem %s14, %s492
        $region76: #{chameleon_forward.1} parent=43 // pred_fallthru
          _
      $region44: #{chameleon_forward.1} parent=5 // pred_fallthru
        _
      %p494 = scmp.le.s32.totalorder 1, %s22
      %p495 = scmp.lt.s32.totalorder %s22, 3
      %p496 = pnand %p494, %p495
      %p497 = pneg %p496
      // Predicated region
      $region77: #{chameleon_forward.1} parent=5 // pred_check
        _
      $region78: #{chameleon_forward.1} parent=5 // pred_check_branch
        %499 = sbr.rel (%p496) target = $region80
      $region79: #{chameleon_forward.1} parent=5 // pred_region
        %s500 = ssub.s32 %s22, 1
        %p501 = pneg %p43
        %p502 = pneg %p40
        %p503 = pneg %p64
        %p504 = pneg %p61
        %p505 = pneg %p85
        %p506 = pneg %p82
        %p507 = pneg %p106
        %p508 = pneg %p103
        %p509 = pneg %p127
        %p510 = pneg %p124
        %p511 = pneg %p148
        %p512 = pneg %p145
        %p513 = pneg %p169
        %p514 = pneg %p166
        %p515 = scmp.lt.s32.totalorder %s27, 1
        %s516 = scalar_select %p515, %s27, 1
        %s517 = smul.addr %s516, 8
        %s518 = smul.addr %s517, 4
        %s519 = scalar_lea.vmem %s7, %s518
        %p520 = pneg %p195
        %p521 = pneg %p192
        %p522 = scmp.lt.s32.totalorder %s27, 1
        %s523 = scalar_select %p522, %s27, 1
        %s524 = smul.addr %s523, 8
        %s525 = smul.addr %s524, 4
        %s526 = scalar_lea.vmem %s8, %s525
        %p527 = pneg %p221
        %p528 = pneg %p218
        %p529 = scmp.lt.s32.totalorder %s27, 1
        %s530 = scalar_select %p529, %s27, 1
        %s531 = scalar_lea.vmem %s9, %s530
        %p532 = pneg %p247
        %p533 = pneg %p244
        %p534 = scmp.lt.s32.totalorder %s27, 1
        %s535 = scalar_select %p534, %s27, 1
        %s536 = scalar_lea.vmem %s10, %s535
        %p537 = pneg %p273
        %p538 = pneg %p270
        %p539 = scmp.lt.s32.totalorder %s27, 1
        %s540 = scalar_select %p539, %s27, 1
        %s541 = scalar_lea.vmem %s11, %s540
        %p542 = pneg %p299
        %p543 = pneg %p296
        %p544 = scmp.lt.s32.totalorder %s27, 1
        %s545 = scalar_select %p544, %s27, 1
        %s546 = scalar_lea.vmem %s12, %s545
        %p547 = pneg %p325
        %p548 = pneg %p322
        %p549 = scmp.lt.s32.totalorder %s27, 1
        %s550 = scalar_select %p549, %s27, 1
        %s551 = smul.addr %s550, 16
        %s552 = smul.addr %s551, 4
        %s553 = scalar_lea.vmem %s13, %s552
        %p554 = pneg %p351
        %p555 = pneg %p348
        %p556 = scmp.lt.s32.totalorder %s27, 1
        %s557 = scalar_select %p556, %s27, 1
        %s558 = smul.addr %s557, 16
        %s559 = smul.addr %s558, 4
        %s560 = scalar_lea.vmem %s14, %s559
        %p561 = pneg %p377
        %p562 = pneg %p374
        %p563 = pneg %p398
        %p564 = pneg %p395
        %p565 = scmp.lt.s32.totalorder %s27, 1
        %s566 = scalar_select %p565, %s27, 1
        %s567 = smul.addr %s566, 8
        %s568 = smul.addr %s567, 4
        %s569 = scalar_lea.vmem %s7, %s568
        %p570 = scmp.lt.s32.totalorder %s27, 1
        %s571 = scalar_select %p570, %s27, 1
        %s572 = smul.addr %s571, 8
        %s573 = smul.addr %s572, 4
        %s574 = scalar_lea.vmem %s8, %s573
        %p575 = scmp.lt.s32.totalorder %s27, 1
        %s576 = scalar_select %p575, %s27, 1
        %s577 = scalar_lea.vmem %s9, %s576
        %p578 = scmp.lt.s32.totalorder %s27, 1
        %s579 = scalar_select %p578, %s27, 1
        %s580 = scalar_lea.vmem %s10, %s579
        %p581 = scmp.lt.s32.totalorder %s27, 1
        %s582 = scalar_select %p581, %s27, 1
        %s583 = scalar_lea.vmem %s11, %s582
        %p584 = scmp.lt.s32.totalorder %s27, 1
        %s585 = scalar_select %p584, %s27, 1
        %s586 = scalar_lea.vmem %s12, %s585
        %p587 = scmp.lt.s32.totalorder %s27, 1
        %s588 = scalar_select %p587, %s27, 1
        %s589 = smul.addr %s588, 16
        %s590 = smul.addr %s589, 4
        %s591 = scalar_lea.vmem %s13, %s590
        %p592 = scmp.lt.s32.totalorder %s27, 1
        %s593 = scalar_select %p592, %s27, 1
        %s594 = smul.addr %s593, 16
        %s595 = smul.addr %s594, 4
        %s596 = scalar_lea.vmem %s14, %s595
        %p598 = scmp.eq.s32.totalorder %s27, 0
        // Predicated region
        $region81: #{chameleon_forward.1} parent=79 // pred_check
          %p599 = pneg %p598
        $region82: #{chameleon_forward.1} parent=79 // pred_check_branch
          %601 = sbr.rel (%p599) target = $region84
        $region83: #{chameleon_forward.1} parent=79 // pred_region
          %v602 = vld [vmem:[%s0] sm:$0xff]
          %vm603 = vcmask 523264
          %604 = vst.msk [vmem:[#allocation2] sm:$0xff] %vm603, %v602
        $region84: #{chameleon_forward.1} parent=79 // pred_fallthru
          _
        %v605 = vld [vmem:[#allocation2] sm:$0xff]
        %v606 = vld [vmem:[%s577] sm:$0x1]
        %v607 = vmul.f32 %v605, %v605
        %vm608 = vcmask 523264
        %v609 = vsel %vm608, %v607, 0.0
        %610 = vadd.xlane.f32.xlu0 %v609
        %v611 = vpop.xlane.xlu0 %610
        %v612 = vrcp.pop 64.0
        %v613 = vmul.f32 64.0, %v612
        %v614 = vsub.f32 1.0, %v613
        %v615 = vmul.f32 %v612, %v614
        %v616 = vadd.f32 %v612, %v615
        %vm617 = vweird.f32 %v612
        %v618 = vsel %vm617, %v612, %v616
        %v619 = vmul.f32 %v611, %v618
        %v620 = vadd.f32 %v619, 1e-05
        %v621 = vrsqrt.pop %v620
        %v622 = vmul.f32 %v621, %v620
        %v623 = vmul.f32 %v622, %v621
        %v624 = vmul.f32 0.5, %v623
        %v625 = vsub.f32 1.5, %v624
        %v626 = vmul.f32 %v621, %v625
        %vm627 = vweird.f32 %v620
        %vm628 = vweird.f32 %v621
        %vm629 = vmor %vm627, %vm628
        %v630 = vsel %vm629, %v621, %v626
        %v631 = vmul.f32 %v605, %v630
        %v633 = vperm.slane %v606, 0
        %v635 = vmul.f32 %v631, %v633
        %v636 = vld [vmem:[%s569] sm:$0xf]
        %v637 = vld [vmem:[%s569 + $0x4] sm:$0xf]
        %v638 = vld [vmem:[%s569 + $0x8] sm:$0xf]
        %v639 = vld [vmem:[%s569 + $0xc] sm:$0xf]
        %v640 = vld [vmem:[%s569 + $0x10] sm:$0xf]
        %v641 = vld [vmem:[%s569 + $0x14] sm:$0xf]
        %v642 = vld [vmem:[%s569 + $0x18] sm:$0xf]
        %v643 = vld [vmem:[%s569 + $0x1c] sm:$0xf]
        %v644 = vpack.c.bf16 %v635, %v635
        %v653 = vunpack.c.l.b16 %v636
        %v654 = vunpack.c.l.b16 %v637
        %v655 = vunpack.c.l.b16 %v638
        %v656 = vunpack.c.l.b16 %v639
        %v657 = vunpack.c.l.b16 %v640
        %v658 = vunpack.c.l.b16 %v641
        %v659 = vunpack.c.l.b16 %v642
        %v660 = vunpack.c.l.b16 %v643
        %v661 = vpack.c.b16 %v654, %v653
        %v662 = vpack.c.b16 %v656, %v655
        %v663 = vpack.c.b16 %v658, %v657
        %v664 = vpack.c.b16 %v660, %v659
        %v670 = vsel %vm608, %v644, 0
        %672 = vmatpush.bf16.msra.mxu0 0
        %673 = vmatpush.bf16.msra.mxu0 0
        %674 = vmatpush.bf16.msra.mxu0 0
        %675 = vmatpush.bf16.msra.mxu0 0
        %676 = vmatpush.bf16.msra.mxu0 %v664
        %677 = vmatpush.bf16.msra.mxu0 %v663
        %678 = vmatpush.bf16.msra.mxu0 %v662
        %679 = vmatpush.bf16.msra.mxu0 %v661
        %680 = vmatmul.bf16.gmra.mxu0 %v670
        %v681 = vpop.f32.mrf.mxu0
        %v682 = vadd.f32 0.0, %v681
        %v683 = vpop.f32.mrf.mxu0
        %684 = vdwg.mxu0
        %v685 = vld [vmem:[%s3] sm:$0xf]
        %v686 = vld [vmem:[%s3 + $0x4] sm:$0xf]
        %v687 = vld [vmem:[%s3 + $0x8] sm:$0xf]
        %v688 = vld [vmem:[%s3 + $0xc] sm:$0xf]
        %v689 = vld [vmem:[%s3 + $0x10] sm:$0xf]
        %v690 = vld [vmem:[%s3 + $0x14] sm:$0xf]
        %v691 = vld [vmem:[%s3 + $0x18] sm:$0xf]
        %v692 = vld [vmem:[%s3 + $0x1c] sm:$0xf]
        %v693 = vld [vmem:[%s3 + $0x20] sm:$0xf]
        %v694 = vld [vmem:[%s3 + $0x24] sm:$0xf]
        %v695 = vld [vmem:[%s3 + $0x28] sm:$0xf]
        %v696 = vld [vmem:[%s3 + $0x2c] sm:$0xf]
        %v697 = vld [vmem:[%s3 + $0x30] sm:$0xf]
        %v698 = vld [vmem:[%s3 + $0x34] sm:$0xf]
        %v699 = vld [vmem:[%s3 + $0x38] sm:$0xf]
        %v700 = vld [vmem:[%s3 + $0x3c] sm:$0xf]
        %v701 = vpack.c.bf16 %v682, %v682
        %v702 = vmul.f32 %v682, %v682
        %v703 = vpack.c.bf16 %v702, %v702
        %v720 = vunpack.c.l.b16 %v685
        %v721 = vunpack.c.l.b16 %v686
        %v722 = vunpack.c.l.b16 %v687
        %v723 = vunpack.c.l.b16 %v688
        %v724 = vunpack.c.l.b16 %v689
        %v725 = vunpack.c.l.b16 %v690
        %v726 = vunpack.c.l.b16 %v691
        %v727 = vunpack.c.l.b16 %v692
        %v728 = vunpack.c.l.b16 %v693
        %v729 = vunpack.c.l.b16 %v694
        %v730 = vunpack.c.l.b16 %v695
        %v731 = vunpack.c.l.b16 %v696
        %v732 = vunpack.c.l.b16 %v697
        %v733 = vunpack.c.l.b16 %v698
        %v734 = vunpack.c.l.b16 %v699
        %v735 = vunpack.c.l.b16 %v700
        %v736 = vpack.c.b16 %v721, %v720
        %v737 = vpack.c.b16 %v723, %v722
        %v738 = vpack.c.b16 %v725, %v724
        %v739 = vpack.c.b16 %v727, %v726
        %v740 = vpack.c.b16 %v729, %v728
        %v741 = vpack.c.b16 %v731, %v730
        %v742 = vpack.c.b16 %v733, %v732
        %v743 = vpack.c.b16 %v735, %v734
        %752 = vmatpush.bf16.msra.mxu0 %v743
        %753 = vmatpush.bf16.msra.mxu0 %v742
        %754 = vmatpush.bf16.msra.mxu0 %v741
        %755 = vmatpush.bf16.msra.mxu0 %v740
        %756 = vmatpush.bf16.msra.mxu0 %v739
        %757 = vmatpush.bf16.msra.mxu0 %v738
        %758 = vmatpush.bf16.msra.mxu0 %v737
        %759 = vmatpush.bf16.msra.mxu0 %v736
        %760 = vmatmul.bf16.gmra.mxu0 %v701
        %v761 = vpop.f32.mrf.mxu0
        %v762 = vadd.f32 0.0, %v761
        %v763 = vpop.f32.mrf.mxu0
        %764 = vdwg.mxu0
        %765 = vmatpush.bf16.msra.mxu0 %v743
        %766 = vmatpush.bf16.msra.mxu0 %v742
        %767 = vmatpush.bf16.msra.mxu0 %v741
        %768 = vmatpush.bf16.msra.mxu0 %v740
        %769 = vmatpush.bf16.msra.mxu0 %v739
        %770 = vmatpush.bf16.msra.mxu0 %v738
        %771 = vmatpush.bf16.msra.mxu0 %v737
        %772 = vmatpush.bf16.msra.mxu0 %v736
        %773 = vmatmul.bf16.gmra.mxu0 %v703
        %v774 = vpop.f32.mrf.mxu0
        %v775 = vadd.f32 0.0, %v774
        %v776 = vpop.f32.mrf.mxu0
        %777 = vdwg.mxu0
        %v778 = vmul.f32 %v762, %v762
        %v779 = vsub.f32 %v775, %v778
        %v780 = vmax.f32 %v779, 0.0
        %v781 = vsub.f32 %v682, %v762
        %v782 = vadd.f32 %v780, 1e-05
        %v783 = vrsqrt.pop %v782
        %v784 = vmul.f32 %v783, %v782
        %v785 = vmul.f32 %v784, %v783
        %v786 = vmul.f32 0.5, %v785
        %v787 = vsub.f32 1.5, %v786
        %v788 = vmul.f32 %v783, %v787
        %vm789 = vweird.f32 %v782
        %vm790 = vweird.f32 %v783
        %vm791 = vmor %vm789, %vm790
        %v792 = vsel %vm791, %v783, %v788
        %v793 = vmul.f32 %v781, %v792
        %v794 = vld [vmem:[%s583] sm:$0x1]
        %v796 = vperm.slane %v794, 0
        %v798 = vmul.f32 %v793, %v796
        %v799 = vld [vmem:[%s586] sm:$0x1]
        %v801 = vperm.slane %v799, 0
        %v803 = vadd.f32 %v798, %v801
        %v804 = vpack.c.bf16 %v803, %v803
        %v805 = vld [vmem:[%s4] sm:$0xf]
        %v806 = vld [vmem:[%s4 + $0x4] sm:$0xf]
        %v807 = vld [vmem:[%s4 + $0x8] sm:$0xf]
        %v808 = vld [vmem:[%s4 + $0xc] sm:$0xf]
        %v809 = vld [vmem:[%s4 + $0x10] sm:$0xf]
        %v810 = vld [vmem:[%s4 + $0x14] sm:$0xf]
        %v811 = vld [vmem:[%s4 + $0x18] sm:$0xf]
        %v812 = vld [vmem:[%s4 + $0x1c] sm:$0xf]
        %v813 = vld [vmem:[%s4 + $0x20] sm:$0xf]
        %v814 = vld [vmem:[%s4 + $0x24] sm:$0xf]
        %v815 = vld [vmem:[%s4 + $0x28] sm:$0xf]
        %v816 = vld [vmem:[%s4 + $0x2c] sm:$0xf]
        %v817 = vld [vmem:[%s4 + $0x30] sm:$0xf]
        %v818 = vld [vmem:[%s4 + $0x34] sm:$0xf]
        %v819 = vld [vmem:[%s4 + $0x38] sm:$0xf]
        %v820 = vld [vmem:[%s4 + $0x3c] sm:$0xf]
        %v837 = vunpack.c.l.b16 %v805
        %v838 = vunpack.c.l.b16 %v806
        %v839 = vunpack.c.l.b16 %v807
        %v840 = vunpack.c.l.b16 %v808
        %v841 = vunpack.c.l.b16 %v809
        %v842 = vunpack.c.l.b16 %v810
        %v843 = vunpack.c.l.b16 %v811
        %v844 = vunpack.c.l.b16 %v812
        %v845 = vunpack.c.l.b16 %v813
        %v846 = vunpack.c.l.b16 %v814
        %v847 = vunpack.c.l.b16 %v815
        %v848 = vunpack.c.l.b16 %v816
        %v849 = vunpack.c.l.b16 %v817
        %v850 = vunpack.c.l.b16 %v818
        %v851 = vunpack.c.l.b16 %v819
        %v852 = vunpack.c.l.b16 %v820
        %v853 = vpack.c.b16 %v838, %v837
        %v854 = vpack.c.b16 %v840, %v839
        %v855 = vpack.c.b16 %v842, %v841
        %v856 = vpack.c.b16 %v844, %v843
        %v857 = vpack.c.b16 %v846, %v845
        %v858 = vpack.c.b16 %v848, %v847
        %v859 = vpack.c.b16 %v850, %v849
        %v860 = vpack.c.b16 %v852, %v851
        %869 = vmatpush.bf16.msra.mxu0 %v860
        %870 = vmatpush.bf16.msra.mxu0 %v859
        %871 = vmatpush.bf16.msra.mxu0 %v858
        %872 = vmatpush.bf16.msra.mxu0 %v857
        %873 = vmatpush.bf16.msra.mxu0 %v856
        %874 = vmatpush.bf16.msra.mxu0 %v855
        %875 = vmatpush.bf16.msra.mxu0 %v854
        %876 = vmatpush.bf16.msra.mxu0 %v853
        %877 = vmatmul.bf16.gmra.mxu0 %v804
        %v878 = vpop.f32.mrf.mxu0
        %v879 = vadd.f32 0.0, %v878
        %v880 = vpop.f32.mrf.mxu0
        %881 = vdwg.mxu0
        %v882 = vld [vmem:[%s1] sm:$0xff]
        %v883 = vmul.f32 %v803, %v882
        %v884 = vld [vmem:[%s2] sm:$0xff]
        %v885 = vmul.f32 %v879, %v884
        %v886 = vadd.f32 %v883, %v885
        %v887 = vpack.c.bf16 %v886, %v886
        %v888 = vld [vmem:[%s5] sm:$0xff]
        %v889 = vld [vmem:[%s5 + $0x8] sm:$0xff]
        %v891 = vunpack.c.l.b16 %v887
        %v892 = vpack.c.b16 %v891, %v891
        %893 = vrot.lane.b32.xlu0 %v892, 112
        %v894 = vpop.permute.xlu0 %893
        %vm895 = vcmask 1043456
        %v898 = vsel %vm895, %v887, %v894
        %899 = vrot.lane.b32.xlu0 %v892, 64
        %v900 = vpop.permute.xlu0 %899
        %vm901 = vcmask 130048
        %v902 = vsel %vm901, %v898, 0
        %v905 = vsel %vm901, %v900, 0
        %907 = vmatpush.bf16.xpose.msra.mxu0 0
        %908 = vmatpush.bf16.xpose.msra.mxu0 0
        %909 = vmatpush.bf16.xpose.msra.mxu0 0
        %910 = vmatpush.bf16.xpose.msra.mxu0 0
        %911 = vmatpush.bf16.xpose.msra.mxu0 0
        %912 = vmatpush.bf16.xpose.msra.mxu0 0
        %913 = vmatpush.bf16.xpose.msra.mxu0 0
        %914 = vmatpush.bf16.xpose.msra.mxu0 %v905
        %915 = vmatmul.bf16.gmra.mxu0 %v902
        %v916 = vpop.f32.mrf.mxu0
        %v917 = vadd.f32 %v888, %v916
        %v918 = vpop.f32.mrf.mxu0
        %v919 = vadd.f32 %v889, %v918
        %920 = vdwg.mxu0
        %vm921 = vcmask 64512
        %v922 = vsel %vm921, %v917, -inf
        %923 = vmax.xlane.f32.xlu0 %v922
        %v924 = vpop.xlane.xlu0 %923
        %v925 = vsel %vm921, %v919, -inf
        %926 = vmax.xlane.f32.xlu0 %v925
        %v927 = vpop.xlane.xlu0 %926
        %v928 = vsub.f32 %v917, %v924
        %v929 = vsub.f32 %v919, %v927
        %v930 = vmul.f32 %v928, 1.442695
        %v931 = vpow.pop %v930
        %v932 = vmul.f32 %v929, 1.442695
        %v933 = vpow.pop %v932
        %v934 = vsel %vm921, %v931, 0.0
        %935 = vadd.xlane.f32.xlu0 %v934
        %v936 = vpop.xlane.xlu0 %935
        %v937 = vsel %vm921, %v933, 0.0
        %938 = vadd.xlane.f32.xlu0 %v937
        %v939 = vpop.xlane.xlu0 %938
        %v940 = vrcp.pop %v936
        %v941 = vrcp.pop %v939
        %v942 = vmul.f32 %v931, %v940
        %v943 = vmul.f32 %v933, %v941
        %v944 = vpack.c.bf16 %v943, %v942
        %945 = vrot.lane.b32.xlu0 %v892, 32
        %v946 = vpop.permute.xlu0 %945
        %v948 = vsel %vm921, %v944, 0
        %v951 = vsel %vm895, %v946, 0
        %953 = vmatpush.bf16.msra.mxu0 0
        %954 = vmatpush.bf16.msra.mxu0 0
        %955 = vmatpush.bf16.msra.mxu0 0
        %956 = vmatpush.bf16.msra.mxu0 0
        %957 = vmatpush.bf16.msra.mxu0 0
        %958 = vmatpush.bf16.msra.mxu0 0
        %959 = vmatpush.bf16.msra.mxu0 0
        %960 = vmatpush.bf16.msra.mxu0 %v951
        %961 = vmatmul.bf16.gmra.mxu0 %v948
        %v962 = vpop.f32.mrf.mxu0
        %v963 = vadd.f32 0.0, %v962
        %v964 = vpop.f32.mrf.mxu0
        %v965 = vadd.f32 0.0, %v964
        %966 = vdwg.mxu0
        %968 = vrot.lane.b32.xlu0 %v898, 96
        %v969 = vpop.permute.xlu0 %968
        %970 = vrot.lane.b32.xlu0 %v892, 48
        %v971 = vpop.permute.xlu0 %970
        %v973 = vsel %vm901, %v969, 0
        %v976 = vsel %vm901, %v971, 0
        %978 = vmatpush.bf16.xpose.msra.mxu0 0
        %979 = vmatpush.bf16.xpose.msra.mxu0 0
        %980 = vmatpush.bf16.xpose.msra.mxu0 0
        %981 = vmatpush.bf16.xpose.msra.mxu0 0
        %982 = vmatpush.bf16.xpose.msra.mxu0 0
        %983 = vmatpush.bf16.xpose.msra.mxu0 0
        %984 = vmatpush.bf16.xpose.msra.mxu0 0
        %985 = vmatpush.bf16.xpose.msra.mxu0 %v976
        %986 = vmatmul.bf16.gmra.mxu0 %v973
        %v987 = vpop.f32.mrf.mxu0
        %v988 = vadd.f32 %v888, %v987
        %v989 = vpop.f32.mrf.mxu0
        %v990 = vadd.f32 %v889, %v989
        %991 = vdwg.mxu0
        %v992 = vsel %vm921, %v988, -inf
        %993 = vmax.xlane.f32.xlu0 %v992
        %v994 = vpop.xlane.xlu0 %993
        %v995 = vsel %vm921, %v990, -inf
        %996 = vmax.xlane.f32.xlu0 %v995
        %v997 = vpop.xlane.xlu0 %996
        %v998 = vsub.f32 %v988, %v994
        %v999 = vsub.f32 %v990, %v997
        %v1000 = vmul.f32 %v998, 1.442695
        %v1001 = vpow.pop %v1000
        %v1002 = vmul.f32 %v999, 1.442695
        %v1003 = vpow.pop %v1002
        %v1004 = vsel %vm921, %v1001, 0.0
        %1005 = vadd.xlane.f32.xlu0 %v1004
        %v1006 = vpop.xlane.xlu0 %1005
        %v1007 = vsel %vm921, %v1003, 0.0
        %1008 = vadd.xlane.f32.xlu0 %v1007
        %v1009 = vpop.xlane.xlu0 %1008
        %v1010 = vrcp.pop %v1006
        %v1011 = vrcp.pop %v1009
        %v1012 = vmul.f32 %v1001, %v1010
        %v1013 = vmul.f32 %v1003, %v1011
        %v1014 = vpack.c.bf16 %v1013, %v1012
        %1015 = vrot.lane.b32.xlu0 %v892, 16
        %v1016 = vpop.permute.xlu0 %1015
        %v1018 = vsel %vm921, %v1014, 0
        %v1021 = vsel %vm895, %v1016, 0
        %1023 = vmatpush.bf16.msra.mxu0 0
        %1024 = vmatpush.bf16.msra.mxu0 0
        %1025 = vmatpush.bf16.msra.mxu0 0
        %1026 = vmatpush.bf16.msra.mxu0 0
        %1027 = vmatpush.bf16.msra.mxu0 0
        %1028 = vmatpush.bf16.msra.mxu0 0
        %1029 = vmatpush.bf16.msra.mxu0 0
        %1030 = vmatpush.bf16.msra.mxu0 %v1021
        %1031 = vmatmul.bf16.gmra.mxu0 %v1018
        %v1032 = vpop.f32.mrf.mxu0
        %v1033 = vadd.f32 0.0, %v1032
        %v1034 = vpop.f32.mrf.mxu0
        %v1035 = vadd.f32 0.0, %v1034
        %1036 = vdwg.mxu0
        %1038 = vrot.lane.b32.xlu0 %v965, 16
        %v1039 = vpop.permute.xlu0 %1038
        %1042 = vrot.lane.b32.xlu0 %v1033, 32
        %v1043 = vpop.permute.xlu0 %1042
        %1046 = vrot.lane.b32.xlu0 %v1035, 48
        %v1047 = vpop.permute.xlu0 %1046
        %v1049 = vsel %vm901, %v963, %v1039
        %vm1050 = vcmask 261120
        %v1051 = vsel %vm1050, %v1049, %v1043
        %vm1052 = vcmask 392192
        %v1053 = vsel %vm1052, %v1051, %v1047
        %v1054 = vld [vmem:[%s574] sm:$0xf]
        %v1055 = vld [vmem:[%s574 + $0x4] sm:$0xf]
        %v1056 = vld [vmem:[%s574 + $0x8] sm:$0xf]
        %v1057 = vld [vmem:[%s574 + $0xc] sm:$0xf]
        %v1058 = vld [vmem:[%s574 + $0x10] sm:$0xf]
        %v1059 = vld [vmem:[%s574 + $0x14] sm:$0xf]
        %v1060 = vld [vmem:[%s574 + $0x18] sm:$0xf]
        %v1061 = vld [vmem:[%s574 + $0x1c] sm:$0xf]
        %v1062 = vpack.c.bf16 %v1053, %v1053
        %v1071 = vunpack.c.l.b16 %v1054
        %v1072 = vunpack.c.l.b16 %v1055
        %v1073 = vunpack.c.l.b16 %v1056
        %v1074 = vunpack.c.l.b16 %v1057
        %v1075 = vunpack.c.l.b16 %v1058
        %v1076 = vunpack.c.l.b16 %v1059
        %v1077 = vunpack.c.l.b16 %v1060
        %v1078 = vunpack.c.l.b16 %v1061
        %v1079 = vpack.c.b16 %v1072, %v1071
        %v1080 = vpack.c.b16 %v1074, %v1073
        %v1081 = vpack.c.b16 %v1076, %v1075
        %v1082 = vpack.c.b16 %v1078, %v1077
        %v1088 = vsel %vm608, %v1062, 0
        %1090 = vmatpush.bf16.msra.mxu0 0
        %1091 = vmatpush.bf16.msra.mxu0 0
        %1092 = vmatpush.bf16.msra.mxu0 0
        %1093 = vmatpush.bf16.msra.mxu0 0
        %1094 = vmatpush.bf16.msra.mxu0 %v1082
        %1095 = vmatpush.bf16.msra.mxu0 %v1081
        %1096 = vmatpush.bf16.msra.mxu0 %v1080
        %1097 = vmatpush.bf16.msra.mxu0 %v1079
        %1098 = vmatmul.bf16.gmra.mxu0 %v1088
        %v1099 = vpop.f32.mrf.mxu0
        %v1100 = vadd.f32 %v605, %v1099
        %v1101 = vpop.f32.mrf.mxu0
        %1102 = vdwg.mxu0
        %v1103 = vld [vmem:[%s580] sm:$0x1]
        %v1104 = vmul.f32 %v1100, %v1100
        %v1105 = vsel %vm608, %v1104, 0.0
        %1106 = vadd.xlane.f32.xlu0 %v1105
        %v1107 = vpop.xlane.xlu0 %1106
        %v1108 = vmul.f32 %v1107, %v618
        %v1109 = vadd.f32 %v1108, 1e-05
        %v1110 = vrsqrt.pop %v1109
        %v1111 = vmul.f32 %v1110, %v1109
        %v1112 = vmul.f32 %v1111, %v1110
        %v1113 = vmul.f32 0.5, %v1112
        %v1114 = vsub.f32 1.5, %v1113
        %v1115 = vmul.f32 %v1110, %v1114
        %vm1116 = vweird.f32 %v1109
        %vm1117 = vweird.f32 %v1110
        %vm1118 = vmor %vm1116, %vm1117
        %v1119 = vsel %vm1118, %v1110, %v1115
        %v1120 = vmul.f32 %v1100, %v1119
        %v1122 = vperm.slane %v1103, 0
        %v1124 = vmul.f32 %v1120, %v1122
        %v1125 = vld [vmem:[%s591] sm:$0xff]
        %v1126 = vld [vmem:[%s591 + $0x8] sm:$0xff]
        %v1127 = vld [vmem:[%s591 + $0x10] sm:$0xff]
        %v1128 = vld [vmem:[%s591 + $0x18] sm:$0xff]
        %v1129 = vld [vmem:[%s591 + $0x20] sm:$0xff]
        %v1130 = vld [vmem:[%s591 + $0x28] sm:$0xff]
        %v1131 = vld [vmem:[%s591 + $0x30] sm:$0xff]
        %v1132 = vld [vmem:[%s591 + $0x38] sm:$0xff]
        %v1133 = vpack.c.bf16 %v1124, %v1124
        %v1142 = vunpack.c.l.b16 %v1125
        %v1143 = vunpack.c.h.b16 %v1125
        %v1144 = vunpack.c.l.b16 %v1126
        %v1145 = vunpack.c.h.b16 %v1126
        %v1146 = vunpack.c.l.b16 %v1127
        %v1147 = vunpack.c.h.b16 %v1127
        %v1148 = vunpack.c.l.b16 %v1128
        %v1149 = vunpack.c.h.b16 %v1128
        %v1150 = vunpack.c.l.b16 %v1129
        %v1151 = vunpack.c.h.b16 %v1129
        %v1152 = vunpack.c.l.b16 %v1130
        %v1153 = vunpack.c.h.b16 %v1130
        %v1154 = vunpack.c.l.b16 %v1131
        %v1155 = vunpack.c.h.b16 %v1131
        %v1156 = vunpack.c.l.b16 %v1132
        %v1157 = vunpack.c.h.b16 %v1132
        %v1158 = vpack.c.b16 %v1144, %v1142
        %v1159 = vpack.c.b16 %v1145, %v1143
        %v1160 = vpack.c.b16 %v1148, %v1146
        %v1161 = vpack.c.b16 %v1149, %v1147
        %v1162 = vpack.c.b16 %v1152, %v1150
        %v1163 = vpack.c.b16 %v1153, %v1151
        %v1164 = vpack.c.b16 %v1156, %v1154
        %v1165 = vpack.c.b16 %v1157, %v1155
        %v1175 = vsel %vm608, %v1133, 0
        %1177 = vmatpush.bf16.msra.mxu0 0
        %1178 = vmatpush.bf16.msra.mxu0 0
        %1179 = vmatpush.bf16.msra.mxu0 0
        %1180 = vmatpush.bf16.msra.mxu0 0
        %1181 = vmatpush.bf16.msra.mxu0 %v1164
        %1182 = vmatpush.bf16.msra.mxu0 %v1162
        %1183 = vmatpush.bf16.msra.mxu0 %v1160
        %1184 = vmatpush.bf16.msra.mxu0 %v1158
        %1185 = vmatmul.bf16.gmra.mxu0 %v1175
        %v1186 = vpop.f32.mrf.mxu0
        %v1187 = vadd.f32 0.0, %v1186
        %v1188 = vpop.f32.mrf.mxu0
        %1189 = vdwg.mxu0
        %1190 = vmatpush.bf16.msra.mxu0 0
        %1191 = vmatpush.bf16.msra.mxu0 0
        %1192 = vmatpush.bf16.msra.mxu0 0
        %1193 = vmatpush.bf16.msra.mxu0 0
        %1194 = vmatpush.bf16.msra.mxu0 %v1165
        %1195 = vmatpush.bf16.msra.mxu0 %v1163
        %1196 = vmatpush.bf16.msra.mxu0 %v1161
        %1197 = vmatpush.bf16.msra.mxu0 %v1159
        %1198 = vmatmul.bf16.gmra.mxu0 %v1175
        %v1199 = vpop.f32.mrf.mxu0
        %v1200 = vadd.f32 0.0, %v1199
        %v1201 = vpop.f32.mrf.mxu0
        %1202 = vdwg.mxu0
        %v1203 = vmul.f32 %v1187, 0.5
        %v1204 = vtanh.pop %v1203
        %v1205 = vadd.f32 %v1204, 1.0
        %v1206 = vmul.f32 %v1205, 0.5
        %v1207 = vmul.f32 %v1187, %v1206
        %v1208 = vmul.f32 %v1207, %v1200
        %v1209 = vld [vmem:[%s596] sm:$0xf]
        %v1210 = vld [vmem:[%s596 + $0x4] sm:$0xf]
        %v1211 = vld [vmem:[%s596 + $0x8] sm:$0xf]
        %v1212 = vld [vmem:[%s596 + $0xc] sm:$0xf]
        %v1213 = vld [vmem:[%s596 + $0x10] sm:$0xf]
        %v1214 = vld [vmem:[%s596 + $0x14] sm:$0xf]
        %v1215 = vld [vmem:[%s596 + $0x18] sm:$0xf]
        %v1216 = vld [vmem:[%s596 + $0x1c] sm:$0xf]
        %v1217 = vld [vmem:[%s596 + $0x20] sm:$0xf]
        %v1218 = vld [vmem:[%s596 + $0x24] sm:$0xf]
        %v1219 = vld [vmem:[%s596 + $0x28] sm:$0xf]
        %v1220 = vld [vmem:[%s596 + $0x2c] sm:$0xf]
        %v1221 = vld [vmem:[%s596 + $0x30] sm:$0xf]
        %v1222 = vld [vmem:[%s596 + $0x34] sm:$0xf]
        %v1223 = vld [vmem:[%s596 + $0x38] sm:$0xf]
        %v1224 = vld [vmem:[%s596 + $0x3c] sm:$0xf]
        %v1225 = vpack.c.bf16 %v1208, %v1208
        %v1242 = vunpack.c.l.b16 %v1209
        %v1243 = vunpack.c.l.b16 %v1210
        %v1244 = vunpack.c.l.b16 %v1211
        %v1245 = vunpack.c.l.b16 %v1212
        %v1246 = vunpack.c.l.b16 %v1213
        %v1247 = vunpack.c.l.b16 %v1214
        %v1248 = vunpack.c.l.b16 %v1215
        %v1249 = vunpack.c.l.b16 %v1216
        %v1250 = vunpack.c.l.b16 %v1217
        %v1251 = vunpack.c.l.b16 %v1218
        %v1252 = vunpack.c.l.b16 %v1219
        %v1253 = vunpack.c.l.b16 %v1220
        %v1254 = vunpack.c.l.b16 %v1221
        %v1255 = vunpack.c.l.b16 %v1222
        %v1256 = vunpack.c.l.b16 %v1223
        %v1257 = vunpack.c.l.b16 %v1224
        %v1258 = vpack.c.b16 %v1243, %v1242
        %v1259 = vpack.c.b16 %v1245, %v1244
        %v1260 = vpack.c.b16 %v1247, %v1246
        %v1261 = vpack.c.b16 %v1249, %v1248
        %v1262 = vpack.c.b16 %v1251, %v1250
        %v1263 = vpack.c.b16 %v1253, %v1252
        %v1264 = vpack.c.b16 %v1255, %v1254
        %v1265 = vpack.c.b16 %v1257, %v1256
        %1274 = vmatpush.bf16.msra.mxu0 %v1265
        %1275 = vmatpush.bf16.msra.mxu0 %v1264
        %1276 = vmatpush.bf16.msra.mxu0 %v1263
        %1277 = vmatpush.bf16.msra.mxu0 %v1262
        %1278 = vmatpush.bf16.msra.mxu0 %v1261
        %1279 = vmatpush.bf16.msra.mxu0 %v1260
        %1280 = vmatpush.bf16.msra.mxu0 %v1259
        %1281 = vmatpush.bf16.msra.mxu0 %v1258
        %1282 = vmatmul.bf16.gmra.mxu0 %v1225
        %v1283 = vpop.f32.mrf.mxu0
        %v1284 = vadd.f32 %v1100, %v1283
        %v1285 = vpop.f32.mrf.mxu0
        %1286 = vdwg.mxu0
        %1287 = vst.msk [vmem:[#allocation2] sm:$0xff] %vm608, %v1284
        %p1288 = scmp.eq.s32.totalorder %s27, 1
        // Predicated region
        $region85: #{chameleon_forward.1} parent=79 // pred_check
          %p1289 = pneg %p1288
        $region86: #{chameleon_forward.1} parent=79 // pred_check_branch
          %1291 = sbr.rel (%p1289) target = $region88
        $region87: #{chameleon_forward.1} parent=79 // pred_region
          %v1292 = vld [vmem:[%s6] sm:$0x1]
          %v1293 = vmul.f32 %v1284, %v1284
          %v1294 = vsel %vm608, %v1293, 0.0
          %1295 = vadd.xlane.f32.xlu0 %v1294
          %v1296 = vpop.xlane.xlu0 %1295
          %v1297 = vmul.f32 %v1296, %v618
          %v1298 = vadd.f32 %v1297, 1e-05
          %v1299 = vrsqrt.pop %v1298
          %v1300 = vmul.f32 %v1299, %v1298
          %v1301 = vmul.f32 %v1300, %v1299
          %v1302 = vmul.f32 0.5, %v1301
          %v1303 = vsub.f32 1.5, %v1302
          %v1304 = vmul.f32 %v1299, %v1303
          %vm1305 = vweird.f32 %v1298
          %vm1306 = vweird.f32 %v1299
          %vm1307 = vmor %vm1305, %vm1306
          %v1308 = vsel %vm1307, %v1299, %v1304
          %v1309 = vmul.f32 %v1284, %v1308
          %v1311 = vperm.slane %v1292, 0
          %v1313 = vmul.f32 %v1309, %v1311
          %1314 = vst.msk [vmem:[#allocation3] sm:$0xff] %vm608, %v1313
        $region88: #{chameleon_forward.1} parent=79 // pred_fallthru
          _
        // Predicated region
        $region89: #{chameleon_forward.1} parent=79 // pred_check
          %p1315 = pneg %p395
        $region90: #{chameleon_forward.1} parent=79 // pred_check_branch
          %1317 = sbr.rel (%p1315) target = $region92
        $region91: #{chameleon_forward.1} parent=79 // pred_region
          %1319 = vsyncadd [#allocation4], 0
          %s1321 = sshll.u32 [#allocation3], 4
          %s1322 = int_to_ptr.vmem [resolvable:$true] %s1321
          %s1323 = sshll.u32 %s15, 4
          %s1324 = int_to_ptr.hbm [resolvable:$true] %s1323
          %1326 = dma.vmem_to_hbm [thread:$0]  %s1322, 128, %s1324, [#allocation4]
        $region92: #{chameleon_forward.1} parent=79 // pred_fallthru
          _
        // Predicated region
        $region93: #{chameleon_forward.1} parent=79 // pred_check
          %p1327 = pneg %p395
        $region94: #{chameleon_forward.1} parent=79 // pred_check_branch
          %1329 = sbr.rel (%p1327) target = $region96
        $region95: #{chameleon_forward.1} parent=79 // pred_region
          %1331 = dma.done [#allocation4], 128
        $region96: #{chameleon_forward.1} parent=79 // pred_fallthru
          _
      $region80: #{chameleon_forward.1} parent=5 // pred_fallthru
        _
      %p1332 = scmp.le.s32.totalorder 2, %s22
      // Predicated region
      $region97: #{chameleon_forward.1} parent=5 // pred_check
        %p1333 = pneg %p1332
      $region98: #{chameleon_forward.1} parent=5 // pred_check_branch
        %1335 = sbr.rel (%p1333) target = $region100
      $region99: #{chameleon_forward.1} parent=5 // pred_region
        %s1336 = ssub.s32 %s22, 2
      $region100: #{chameleon_forward.1} parent=5 // pred_fallthru
        _
    $region6: #{chameleon_forward.1} parent=1 // loop_footer
      %s26 = sadd.s32 1, %s22
    $region7: #{chameleon_forward.1} parent=1 // loop_footer_branch
      %21 = sbr.rel target = $region3
    $region8: #{chameleon_forward.1} parent=1 // loop_exit
      _
    %1337 = vsyncpa [#allocation4], 1
    %s1338 = scalar_lea.sflag [#allocation4], 1
    %1339 = vsyncpa %s1338, 1

</llo_original>
